<compile_context>
chip_gen: v6e
topology: v6e:2x2x1
jax: 0.10.0
libtpu: 0.0.40
codegen_flags: <defaults>
</compile_context>

<pallas_src>
import functools

import jax
import jax.numpy as jnp
from jax.experimental import pallas as pl
from jax.experimental.pallas import tpu as pltpu

LN_EPS = 1e-5


def _layernorm_f32(h, gamma, beta):
    # Single-pass variance: the two cross-lane reductions are independent
    # (better XLU/VPU overlap than mean((h-mu)**2)).
    mu = jnp.mean(h, axis=-1, keepdims=True)
    var = jnp.maximum(jnp.mean(h * h, axis=-1, keepdims=True) - mu * mu, 0.0)
    return (h - mu) * jax.lax.rsqrt(var + LN_EPS) * gamma + beta


def mmoe_kernel(x_ref, w_all_ref, vecs_ref, w2_ref, bg_ref, sscale_ref,
                task_out_ref, gate_out_ref, acc_ref, *,
                expert_num, expert_dim, task_num):
    """One batch tile; experts/tasks statically unrolled, gates fused into the
    single big first matmul."""
    x = x_ref[...]                                              # (bt, D_in) bf16

    # One lane-dense MXU matmul for all experts' first Linear AND all gates.
    h_all = jnp.dot(x, w_all_ref[...],
                    preferred_element_type=jnp.float32)         # (bt, E*D_h + pad)

    # ----- gates: slice logits out of the fused matmul, per-task softmax -----
    gbase = expert_num * expert_dim                             # lane-aligned start
    glog = h_all[:, gbase:gbase + task_num * expert_num] + bg_ref[...]  # (bt, T*E)
    gates = []
    for t in range(task_num):                                   # static, tiny
        lt = glog[:, t * expert_num:(t + 1) * expert_num]       # (bt, E)
        lt = lt - jnp.max(lt, axis=-1, keepdims=True)
        p = jnp.exp(lt)
        p = p * pl.reciprocal(jnp.sum(p, axis=-1, keepdims=True), approx=True)
        gates.append(p)
        # NOTE: lane width E=4 -> masked store; tensor is tiny, accepted cost.
        gate_out_ref[t] = p.astype(gate_out_ref.dtype)

    # ----- experts: per-expert LN/ReLU/second Linear, gated accumulate -------
    acc_ref[...] = jnp.zeros_like(acc_ref)
    for e in range(expert_num):                                 # static unroll
        ve = vecs_ref[e]                      # (6, D_h) f32: b1, g1, be1, b2, g2, be2
        h = h_all[:, e * expert_dim:(e + 1) * expert_dim] + ve[0:1, :]
        h = jnp.maximum(_layernorm_f32(h, ve[1:2, :], ve[2:3, :]), 0.0)
        # TODO(synk): nn.Dropout(0.1) is identity in eval mode; training-mode
        # dropout is not implemented.
        h2 = jnp.dot(h.astype(jnp.bfloat16), w2_ref[e],
                     preferred_element_type=jnp.float32) + ve[3:4, :]
        h2 = jnp.maximum(_layernorm_f32(h2, ve[4:5, :], ve[5:6, :]), 0.0)   # (bt, D_h)
        for t in range(task_num):
            acc_ref[t] += gates[t][:, e:e + 1] * h2             # static lane slice

    # ----- finalize: precomputed sigmoid(task_scale), read from SMEM ---------
    for t in range(task_num):
        task_out_ref[t] = (acc_ref[t] * sscale_ref[t]).astype(task_out_ref.dtype)


def pack_params(params, *, input_dim, expert_num, expert_dim, task_num):
    """One-time layout plumbing (hoisted out of the per-call path)."""
    (w1, b1, g1, be1, w2, b2, g2, be2, wg, bg, scale) = params
    n_expert = expert_num * expert_dim
    n_gate = task_num * expert_num
    n_pad = ((n_expert + n_gate + 127) // 128) * 128            # lane-pad fused width
    # first Linear packed across experts + gate Linears packed across tasks,
    # concatenated column-wise and zero-padded to a multiple of 128 lanes.
    w1p = jnp.transpose(w1, (1, 0, 2)).reshape(input_dim, n_expert)
    wgp = jnp.transpose(wg, (1, 0, 2)).reshape(input_dim, n_gate)
    pad = jnp.zeros((input_dim, n_pad - n_expert - n_gate), w1p.dtype)
    w_all = jnp.concatenate([w1p, wgp, pad], axis=1).astype(jnp.bfloat16)
    # six per-expert vectors packed into one array: (E, 6, D_h), kept f32
    vecs = jnp.stack([b1[:, 0], g1[:, 0], be1[:, 0],
                      b2[:, 0], g2[:, 0], be2[:, 0]], axis=1).astype(jnp.float32)
    w2b = w2.astype(jnp.bfloat16)
    bgp = bg.reshape(1, n_gate).astype(jnp.float32)
    sig_scale = jax.nn.sigmoid(scale.reshape(task_num)).astype(jnp.float32)
    return dict(w_all=w_all, vecs=vecs, w2=w2b, bgp=bgp, sig_scale=sig_scale,
                n_pad=n_pad)


def mmoe_forward(x, packed, *, expert_num, expert_dim, task_num, block_b=None):
    B, D_in = x.shape
    n_pad = packed["n_pad"]

    # Batch tile: one "parallel" grid axis.  Default 256 keeps nb >= 2 for
    # large B (v7x megacore) and fits v5e/v7x scoped-VMEM limits; on v6e
    # (128 MiB VMEM) a larger block_b further amortizes the ~0.35 us/step cost.
    if block_b is None:
        block_b = B if B <= 256 else 256
    nb = pl.cdiv(B, block_b)

    # ---- explicit VMEM budget (weights single-buffered, x/outs double) ------
    vmem = 0
    vmem += 2 * block_b * D_in * 2                        # x tile (bf16, x2 buf)
    vmem += D_in * n_pad * 2                              # w_all  (bf16, x1 buf)
    vmem += expert_num * 8 * expert_dim * 4               # vecs (6->8 sublane pad)
    vmem += expert_num * expert_dim * expert_dim * 2      # w2    (bf16, x1 buf)
    vmem += 8 * 128 * 4                                   # bg padded tile
    vmem += 2 * task_num * block_b * expert_dim * 4       # task_out (x2 buf)
    vmem += 2 * task_num * block_b * 128 * 4              # gate_out (lane pad)
    vmem += task_num * block_b * expert_dim * 4           # acc scratch
    vmem += block_b * n_pad * 4                           # h_all live slab
    vmem += 4 * block_b * expert_dim * 4                  # h/h2 temporaries
    vmem_limit = max(32 << 20, min(int(vmem * 1.5) + (2 << 20), 96 << 20))

    flops = 2 * B * D_in * n_pad + expert_num * 2 * B * expert_dim * expert_dim
    transcendentals = B * task_num * expert_num + 2 * expert_num * B
    bytes_accessed = (B * D_in * 2 + D_in * n_pad * 2
                      + expert_num * expert_dim * expert_dim * 2
                      + expert_num * 6 * expert_dim * 4
                      + task_num * B * expert_dim * 4
                      + task_num * B * expert_num * 4)

    kernel = functools.partial(mmoe_kernel, expert_num=expert_num,
                               expert_dim=expert_dim, task_num=task_num)
    once = pl.Buffered(1)   # grid-invariant weights: no double-buffering

    grid_spec = pltpu.PrefetchScalarGridSpec(
        num_scalar_prefetch=0,
        grid=(nb,),
        in_specs=[
            pl.BlockSpec((block_b, D_in), lambda i: (i, 0)),                     # x tile
            pl.BlockSpec((D_in, n_pad), lambda i: (0, 0),
                         pipeline_mode=once),                                    # W1|Wg fused
            pl.BlockSpec((expert_num, 6, expert_dim), lambda i: (0, 0, 0),
                         pipeline_mode=once),                                    # packed vecs
            pl.BlockSpec((expert_num, expert_dim, expert_dim),
                         lambda i: (0, 0, 0), pipeline_mode=once),               # W2 per expert
            pl.BlockSpec((1, task_num * expert_num), lambda i: (0, 0),
                         pipeline_mode=once),                                    # gate bias
            pl.BlockSpec(memory_space=pltpu.MemorySpace.SMEM),                   # sigmoid(scale)
        ],
        out_specs=[
            pl.BlockSpec((task_num, block_b, expert_dim), lambda i: (0, i, 0)),  # task outputs
            pl.BlockSpec((task_num, block_b, expert_num), lambda i: (0, i, 0)),  # gate outputs
        ],
        scratch_shapes=[pltpu.VMEM((task_num, block_b, expert_dim), jnp.float32)],
    )

    task_out, gate_out = pl.pallas_call(
        kernel,
        grid_spec=grid_spec,
        out_shape=(
            jax.ShapeDtypeStruct((task_num, B, expert_dim), x.dtype),
            jax.ShapeDtypeStruct((task_num, B, expert_num), x.dtype),
        ),
        compiler_params=pltpu.CompilerParams(
            dimension_semantics=("parallel",),
            vmem_limit_bytes=vmem_limit),
        cost_estimate=pl.CostEstimate(flops=flops,
                                      transcendentals=transcendentals,
                                      bytes_accessed=bytes_accessed),
    )(x.astype(jnp.bfloat16), packed["w_all"], packed["vecs"], packed["w2"],
      packed["bgp"], packed["sig_scale"])

    task_outputs = [task_out[t] for t in range(task_num)]
    gate_outputs = [gate_out[t] for t in range(task_num)]
    return task_outputs, gate_outputs


def init_params(key, input_dim, expert_num, expert_dim, task_num):
    ks = jax.random.split(key, 10)
    w1 = jax.random.normal(ks[0], (expert_num, input_dim, expert_dim), jnp.float32) * 0.05
    b1 = jax.random.normal(ks[1], (expert_num, 1, expert_dim), jnp.float32) * 0.01
    g1 = 1.0 + 0.1 * jax.random.normal(ks[2], (expert_num, 1, expert_dim), jnp.float32)
    be1 = 0.1 * jax.random.normal(ks[3], (expert_num, 1, expert_dim), jnp.float32)
    w2 = jax.random.normal(ks[4], (expert_num, expert_dim, expert_dim), jnp.float32) * 0.05
    b2 = jax.random.normal(ks[5], (expert_num, 1, expert_dim), jnp.float32) * 0.01
    g2 = 1.0 + 0.1 * jax.random.normal(ks[6], (expert_num, 1, expert_dim), jnp.float32)
    be2 = 0.1 * jax.random.normal(ks[7], (expert_num, 1, expert_dim), jnp.float32)
    wg = jax.random.normal(ks[8], (task_num, input_dim, expert_num), jnp.float32) * 0.05
    bg = jax.random.normal(ks[9], (task_num, 1, expert_num), jnp.float32) * 0.01
    scale = jnp.ones((task_num,), jnp.float32)  # nn.Parameter(torch.ones(task_num))
    return (w1, b1, g1, be1, w2, b2, g2, be2, wg, bg, scale)


def mmoe_reference(x, params, *, expert_num, expert_dim, task_num):
    """Pure-JAX f32 reference mirroring the PyTorch MMOELayer forward (eval)."""
    (w1, b1, g1, be1, w2, b2, g2, be2, wg, bg, scale) = params

    def ln(h, g, b):
        mu = jnp.mean(h, axis=-1, keepdims=True)
        var = jnp.mean((h - mu) ** 2, axis=-1, keepdims=True)
        return (h - mu) * jax.lax.rsqrt(var + LN_EPS) * g + b

    expert_outs = []
    for e in range(expert_num):
        h = x @ w1[e] + b1[e]
        h = jax.nn.relu(ln(h, g1[e], be1[e]))
        h = h @ w2[e] + b2[e]
        h = jax.nn.relu(ln(h, g2[e], be2[e]))
        expert_outs.append(h)
    expert_outs = jnp.stack(expert_outs, axis=1)              # (B, E, D_h)
    task_outs, gate_outs = [], []
    for t in range(task_num):
        g = jax.nn.softmax(x @ wg[t] + bg[t], axis=-1)        # (B, E)
        gate_outs.append(g)
        to = jnp.sum(expert_outs * g[:, :, None], axis=1)
        task_outs.append(to * jax.nn.sigmoid(scale[t]))
    return task_outs, gate_outs


if __name__ == "__main__":
    # Small but lane-dense shapes consistent with the module
    # (production: hidden=768, expert_num=4, expert_dim=512, task_num=2).
    B, input_dim, expert_num, expert_dim, task_num = 8, 128, 4, 128, 2

    key = jax.random.PRNGKey(0)
    kx, kp = jax.random.split(key)
    x = jax.random.normal(kx, (B, input_dim), jnp.float32)
    params = init_params(kp, input_dim, expert_num, expert_dim, task_num)
    packed = pack_params(params, input_dim=input_dim, expert_num=expert_num,
                         expert_dim=expert_dim, task_num=task_num)

    task_outputs, gate_outputs = mmoe_forward(
        x, packed, expert_num=expert_num, expert_dim=expert_dim,
        task_num=task_num)
    jax.block_until_ready(task_outputs)
    jax.block_until_ready(gate_outputs)

    ref_tasks, ref_gates = mmoe_reference(x, params, expert_num=expert_num,
                                          expert_dim=expert_dim, task_num=task_num)
    # Kernel uses bf16 MXU operands (f32 accumulation) -> looser tolerance
    # than the all-f32 reference.
    for got, want in zip(task_outputs, ref_tasks):
        assert jnp.allclose(got, want, atol=5e-2, rtol=5e-2), "task output mismatch"
    for got, want in zip(gate_outputs, ref_gates):
        assert jnp.allclose(got, want, atol=5e-2, rtol=5e-2), "gate output mismatch"

    print("KERNEL_OK")
</pallas_src>

<mosaic_0001>
module attributes {stable_mosaic.version = 11 : i64} {
  func.func @mmoe_kernel(%arg0: i32, %arg1: memref<8x128xbf16, #tpu.memory_space<vmem>>, %arg2: memref<128x640xbf16, #tpu.memory_space<vmem>>, %arg3: memref<4x6x128xf32, #tpu.memory_space<vmem>>, %arg4: memref<4x128x128xbf16, #tpu.memory_space<vmem>>, %arg5: memref<1x8xf32, #tpu.memory_space<vmem>>, %arg6: memref<2xf32, #tpu.memory_space<smem>>, %arg7: memref<2x8x128xf32, #tpu.memory_space<vmem>>, %arg8: memref<2x8x4xf32, #tpu.memory_space<vmem>>, %arg9: memref<2x8x128xf32, #tpu.memory_space<vmem>>) attributes {dimension_semantics = [#tpu.dimension_semantics<parallel>], iteration_bounds = array<i64: 1>, scalar_prefetch = 0 : i64, scratch_operands = 1 : i64, tpu.core_type = #tpu.core_type<tc>, window_params = [{transform_indices = @transform_0, window_bounds = array<i64: 8, 128>}, {pipeline_mode = #tpu.pipeline_mode<synchronous>, transform_indices = @transform_1, window_bounds = array<i64: 128, 640>}, {pipeline_mode = #tpu.pipeline_mode<synchronous>, transform_indices = @transform_2, window_bounds = array<i64: 4, 6, 128>}, {pipeline_mode = #tpu.pipeline_mode<synchronous>, transform_indices = @transform_3, window_bounds = array<i64: 4, 128, 128>}, {pipeline_mode = #tpu.pipeline_mode<synchronous>, transform_indices = @transform_4, window_bounds = array<i64: 1, 8>}, {transform_indices = @transform_5, window_bounds = array<i64: 2>}, {transform_indices = @transform_6, window_bounds = array<i64: 2, 8, 128>}, {transform_indices = @transform_7, window_bounds = array<i64: 2, 8, 4>}]} {
    %c0 = arith.constant 0 : index
    %c0_0 = arith.constant 0 : index
    %0 = vector.load %arg1[%c0, %c0_0] : memref<8x128xbf16, #tpu.memory_space<vmem>>, vector<8x128xbf16>
    %c0_1 = arith.constant 0 : index
    %c0_2 = arith.constant 0 : index
    %1 = vector.load %arg2[%c0_1, %c0_2] : memref<128x640xbf16, #tpu.memory_space<vmem>>, vector<128x640xbf16>
    %cst = arith.constant dense<0.000000e+00> : vector<8x640xf32>
    %2 = tpu.matmul %0, %1, %cst {dimension_numbers = #tpu.dot_dimension_numbers<[1], [0], [0], [1], [0, 0, 1, 1], [], []>} : vector<8x128xbf16>, vector<128x640xbf16>, vector<8x640xf32> -> vector<8x640xf32>
    %3 = vector.extract_strided_slice %2 {offsets = [0, 512], sizes = [8, 8], strides = [1, 1]} : vector<8x640xf32> to vector<8x8xf32>
    %c0_3 = arith.constant 0 : index
    %c0_4 = arith.constant 0 : index
    %4 = vector.load %arg5[%c0_3, %c0_4] : memref<1x8xf32, #tpu.memory_space<vmem>>, vector<1x8xf32>
    %5 = vector.broadcast %4 : vector<1x8xf32> to vector<8x8xf32>
    %6 = arith.addf %3, %5 : vector<8x8xf32>
    %7 = vector.extract_strided_slice %6 {offsets = [0, 0], sizes = [8, 4], strides = [1, 1]} : vector<8x8xf32> to vector<8x4xf32>
    %cst_5 = arith.constant dense<0xFF800000> : vector<8xf32>
    %8 = vector.multi_reduction <maximumf>, %7, %cst_5 [1] : vector<8x4xf32> to vector<8xf32>
    %9 = vector.shape_cast %8 : vector<8xf32> to vector<8x1xf32>
    %10 = vector.broadcast %9 : vector<8x1xf32> to vector<8x4xf32>
    %11 = arith.subf %7, %10 : vector<8x4xf32>
    %12 = math.exp %11 : vector<8x4xf32>
    %cst_6 = arith.constant dense<0.000000e+00> : vector<8xf32>
    %13 = vector.multi_reduction <add>, %12, %cst_6 [1] : vector<8x4xf32> to vector<8xf32>
    %14 = vector.shape_cast %13 : vector<8xf32> to vector<8x1xf32>
    %15 = tpu.reciprocal %14 {approx = true} : vector<8x1xf32> -> vector<8x1xf32>
    %16 = vector.broadcast %15 : vector<8x1xf32> to vector<8x4xf32>
    %17 = arith.mulf %12, %16 : vector<8x4xf32>
    %c0_7 = arith.constant 0 : index
    %c0_8 = arith.constant 0 : index
    %c0_9 = arith.constant 0 : index
    %18 = vector.load %arg8[%c0_7, %c0_8, %c0_9] : memref<2x8x4xf32, #tpu.memory_space<vmem>>, vector<1x8x4xf32>
    %19 = vector.shape_cast %18 : vector<1x8x4xf32> to vector<8x4xf32>
    %20 = vector.shape_cast %17 : vector<8x4xf32> to vector<1x8x4xf32>
    tpu.vector_store %arg8[%c0_7, %c0_8, %c0_9], %20 {strides = array<i32>} : memref<2x8x4xf32, #tpu.memory_space<vmem>>, vector<1x8x4xf32>,
    %21 = vector.extract_strided_slice %6 {offsets = [0, 4], sizes = [8, 4], strides = [1, 1]} : vector<8x8xf32> to vector<8x4xf32>
    %cst_10 = arith.constant dense<0xFF800000> : vector<8xf32>
    %22 = vector.multi_reduction <maximumf>, %21, %cst_10 [1] : vector<8x4xf32> to vector<8xf32>
    %23 = vector.shape_cast %22 : vector<8xf32> to vector<8x1xf32>
    %24 = vector.broadcast %23 : vector<8x1xf32> to vector<8x4xf32>
    %25 = arith.subf %21, %24 : vector<8x4xf32>
    %26 = math.exp %25 : vector<8x4xf32>
    %cst_11 = arith.constant dense<0.000000e+00> : vector<8xf32>
    %27 = vector.multi_reduction <add>, %26, %cst_11 [1] : vector<8x4xf32> to vector<8xf32>
    %28 = vector.shape_cast %27 : vector<8xf32> to vector<8x1xf32>
    %29 = tpu.reciprocal %28 {approx = true} : vector<8x1xf32> -> vector<8x1xf32>
    %30 = vector.broadcast %29 : vector<8x1xf32> to vector<8x4xf32>
    %31 = arith.mulf %26, %30 : vector<8x4xf32>
    %c1 = arith.constant 1 : index
    %c0_12 = arith.constant 0 : index
    %c0_13 = arith.constant 0 : index
    %32 = vector.load %arg8[%c1, %c0_12, %c0_13] : memref<2x8x4xf32, #tpu.memory_space<vmem>>, vector<1x8x4xf32>
    %33 = vector.shape_cast %32 : vector<1x8x4xf32> to vector<8x4xf32>
    %34 = vector.shape_cast %31 : vector<8x4xf32> to vector<1x8x4xf32>
    tpu.vector_store %arg8[%c1, %c0_12, %c0_13], %34 {strides = array<i32>} : memref<2x8x4xf32, #tpu.memory_space<vmem>>, vector<1x8x4xf32>,
    %cst_14 = arith.constant 0.000000e+00 : f32
    %35 = vector.broadcast %cst_14 : f32 to vector<2x8x128xf32>
    %c0_15 = arith.constant 0 : index
    %c0_16 = arith.constant 0 : index
    %c0_17 = arith.constant 0 : index
    %36 = vector.load %arg9[%c0_15, %c0_16, %c0_17] : memref<2x8x128xf32, #tpu.memory_space<vmem>>, vector<2x8x128xf32>
    tpu.vector_store %arg9[%c0_15, %c0_16, %c0_17], %35 {strides = array<i32>} : memref<2x8x128xf32, #tpu.memory_space<vmem>>, vector<2x8x128xf32>,
    %c0_18 = arith.constant 0 : index
    %c0_19 = arith.constant 0 : index
    %c0_20 = arith.constant 0 : index
    %37 = vector.load %arg3[%c0_18, %c0_19, %c0_20] : memref<4x6x128xf32, #tpu.memory_space<vmem>>, vector<1x6x128xf32>
    %38 = vector.shape_cast %37 : vector<1x6x128xf32> to vector<6x128xf32>
    %39 = vector.extract_strided_slice %2 {offsets = [0, 0], sizes = [8, 128], strides = [1, 1]} : vector<8x640xf32> to vector<8x128xf32>
    %40 = vector.extract_strided_slice %38 {offsets = [0, 0], sizes = [1, 128], strides = [1, 1]} : vector<6x128xf32> to vector<1x128xf32>
    %41 = vector.broadcast %40 : vector<1x128xf32> to vector<8x128xf32>
    %42 = arith.addf %39, %41 : vector<8x128xf32>
    %43 = vector.extract_strided_slice %38 {offsets = [1, 0], sizes = [1, 128], strides = [1, 1]} : vector<6x128xf32> to vector<1x128xf32>
    %44 = vector.extract_strided_slice %38 {offsets = [2, 0], sizes = [1, 128], strides = [1, 1]} : vector<6x128xf32> to vector<1x128xf32>
    %cst_21 = arith.constant dense<0.000000e+00> : vector<8xf32>
    %45 = vector.multi_reduction <add>, %42, %cst_21 [1] : vector<8x128xf32> to vector<8xf32>
    %46 = vector.shape_cast %45 : vector<8xf32> to vector<8x1xf32>
    %cst_22 = arith.constant 1.280000e+02 : f32
    %47 = vector.broadcast %cst_22 : f32 to vector<8x1xf32>
    %48 = arith.divf %46, %47 : vector<8x1xf32>
    %49 = arith.mulf %42, %42 : vector<8x128xf32>
    %cst_23 = arith.constant dense<0.000000e+00> : vector<8xf32>
    %50 = vector.multi_reduction <add>, %49, %cst_23 [1] : vector<8x128xf32> to vector<8xf32>
    %51 = vector.shape_cast %50 : vector<8xf32> to vector<8x1xf32>
    %cst_24 = arith.constant 1.280000e+02 : f32
    %52 = vector.broadcast %cst_24 : f32 to vector<8x1xf32>
    %53 = arith.divf %51, %52 : vector<8x1xf32>
    %54 = arith.mulf %48, %48 : vector<8x1xf32>
    %55 = arith.subf %53, %54 : vector<8x1xf32>
    %cst_25 = arith.constant 0.000000e+00 : f32
    %56 = vector.broadcast %cst_25 : f32 to vector<8x1xf32>
    %57 = arith.maximumf %55, %56 : vector<8x1xf32>
    %58 = vector.broadcast %48 : vector<8x1xf32> to vector<8x128xf32>
    %59 = arith.subf %42, %58 : vector<8x128xf32>
    %cst_26 = arith.constant 9.99999974E-6 : f32
    %60 = vector.broadcast %cst_26 : f32 to vector<8x1xf32>
    %61 = arith.addf %57, %60 : vector<8x1xf32>
    %62 = math.rsqrt %61 : vector<8x1xf32>
    %63 = vector.broadcast %62 : vector<8x1xf32> to vector<8x128xf32>
    %64 = arith.mulf %59, %63 : vector<8x128xf32>
    %65 = vector.broadcast %43 : vector<1x128xf32> to vector<8x128xf32>
    %66 = arith.mulf %64, %65 : vector<8x128xf32>
    %67 = vector.broadcast %44 : vector<1x128xf32> to vector<8x128xf32>
    %68 = arith.addf %66, %67 : vector<8x128xf32>
    %cst_27 = arith.constant 0.000000e+00 : f32
    %69 = vector.broadcast %cst_27 : f32 to vector<8x128xf32>
    %70 = arith.maximumf %68, %69 : vector<8x128xf32>
    %71 = arith.truncf %70 : vector<8x128xf32> to vector<8x128xbf16>
    %c0_28 = arith.constant 0 : index
    %c0_29 = arith.constant 0 : index
    %c0_30 = arith.constant 0 : index
    %72 = vector.load %arg4[%c0_28, %c0_29, %c0_30] : memref<4x128x128xbf16, #tpu.memory_space<vmem>>, vector<1x128x128xbf16>
    %73 = vector.shape_cast %72 : vector<1x128x128xbf16> to vector<128x128xbf16>
    %cst_31 = arith.constant dense<0.000000e+00> : vector<8x128xf32>
    %74 = tpu.matmul %71, %73, %cst_31 {dimension_numbers = #tpu.dot_dimension_numbers<[1], [0], [0], [1], [0, 0, 1, 1], [], []>} : vector<8x128xbf16>, vector<128x128xbf16>, vector<8x128xf32> -> vector<8x128xf32>
    %75 = vector.extract_strided_slice %38 {offsets = [3, 0], sizes = [1, 128], strides = [1, 1]} : vector<6x128xf32> to vector<1x128xf32>
    %76 = vector.broadcast %75 : vector<1x128xf32> to vector<8x128xf32>
    %77 = arith.addf %74, %76 : vector<8x128xf32>
    %78 = vector.extract_strided_slice %38 {offsets = [4, 0], sizes = [1, 128], strides = [1, 1]} : vector<6x128xf32> to vector<1x128xf32>
    %79 = vector.extract_strided_slice %38 {offsets = [5, 0], sizes = [1, 128], strides = [1, 1]} : vector<6x128xf32> to vector<1x128xf32>
    %cst_32 = arith.constant dense<0.000000e+00> : vector<8xf32>
    %80 = vector.multi_reduction <add>, %77, %cst_32 [1] : vector<8x128xf32> to vector<8xf32>
    %81 = vector.shape_cast %80 : vector<8xf32> to vector<8x1xf32>
    %cst_33 = arith.constant 1.280000e+02 : f32
    %82 = vector.broadcast %cst_33 : f32 to vector<8x1xf32>
    %83 = arith.divf %81, %82 : vector<8x1xf32>
    %84 = arith.mulf %77, %77 : vector<8x128xf32>
    %cst_34 = arith.constant dense<0.000000e+00> : vector<8xf32>
    %85 = vector.multi_reduction <add>, %84, %cst_34 [1] : vector<8x128xf32> to vector<8xf32>
    %86 = vector.shape_cast %85 : vector<8xf32> to vector<8x1xf32>
    %cst_35 = arith.constant 1.280000e+02 : f32
    %87 = vector.broadcast %cst_35 : f32 to vector<8x1xf32>
    %88 = arith.divf %86, %87 : vector<8x1xf32>
    %89 = arith.mulf %83, %83 : vector<8x1xf32>
    %90 = arith.subf %88, %89 : vector<8x1xf32>
    %cst_36 = arith.constant 0.000000e+00 : f32
    %91 = vector.broadcast %cst_36 : f32 to vector<8x1xf32>
    %92 = arith.maximumf %90, %91 : vector<8x1xf32>
    %93 = vector.broadcast %83 : vector<8x1xf32> to vector<8x128xf32>
    %94 = arith.subf %77, %93 : vector<8x128xf32>
    %cst_37 = arith.constant 9.99999974E-6 : f32
    %95 = vector.broadcast %cst_37 : f32 to vector<8x1xf32>
    %96 = arith.addf %92, %95 : vector<8x1xf32>
    %97 = math.rsqrt %96 : vector<8x1xf32>
    %98 = vector.broadcast %97 : vector<8x1xf32> to vector<8x128xf32>
    %99 = arith.mulf %94, %98 : vector<8x128xf32>
    %100 = vector.broadcast %78 : vector<1x128xf32> to vector<8x128xf32>
    %101 = arith.mulf %99, %100 : vector<8x128xf32>
    %102 = vector.broadcast %79 : vector<1x128xf32> to vector<8x128xf32>
    %103 = arith.addf %101, %102 : vector<8x128xf32>
    %cst_38 = arith.constant 0.000000e+00 : f32
    %104 = vector.broadcast %cst_38 : f32 to vector<8x128xf32>
    %105 = arith.maximumf %103, %104 : vector<8x128xf32>
    %c0_39 = arith.constant 0 : index
    %c0_40 = arith.constant 0 : index
    %c0_41 = arith.constant 0 : index
    %106 = vector.load %arg9[%c0_39, %c0_40, %c0_41] : memref<2x8x128xf32, #tpu.memory_space<vmem>>, vector<1x8x128xf32>
    %107 = vector.shape_cast %106 : vector<1x8x128xf32> to vector<8x128xf32>
    %108 = vector.extract_strided_slice %17 {offsets = [0, 0], sizes = [8, 1], strides = [1, 1]} : vector<8x4xf32> to vector<8x1xf32>
    %109 = vector.broadcast %108 : vector<8x1xf32> to vector<8x128xf32>
    %110 = arith.mulf %109, %105 : vector<8x128xf32>
    %111 = arith.addf %107, %110 : vector<8x128xf32>
    %c0_42 = arith.constant 0 : index
    %c0_43 = arith.constant 0 : index
    %c0_44 = arith.constant 0 : index
    %112 = vector.load %arg9[%c0_42, %c0_43, %c0_44] : memref<2x8x128xf32, #tpu.memory_space<vmem>>, vector<1x8x128xf32>
    %113 = vector.shape_cast %112 : vector<1x8x128xf32> to vector<8x128xf32>
    %114 = vector.shape_cast %111 : vector<8x128xf32> to vector<1x8x128xf32>
    tpu.vector_store %arg9[%c0_42, %c0_43, %c0_44], %114 {strides = array<i32>} : memref<2x8x128xf32, #tpu.memory_space<vmem>>, vector<1x8x128xf32>,
    %c1_45 = arith.constant 1 : index
    %c0_46 = arith.constant 0 : index
    %c0_47 = arith.constant 0 : index
    %115 = vector.load %arg9[%c1_45, %c0_46, %c0_47] : memref<2x8x128xf32, #tpu.memory_space<vmem>>, vector<1x8x128xf32>
    %116 = vector.shape_cast %115 : vector<1x8x128xf32> to vector<8x128xf32>
    %117 = vector.extract_strided_slice %31 {offsets = [0, 0], sizes = [8, 1], strides = [1, 1]} : vector<8x4xf32> to vector<8x1xf32>
    %118 = vector.broadcast %117 : vector<8x1xf32> to vector<8x128xf32>
    %119 = arith.mulf %118, %105 : vector<8x128xf32>
    %120 = arith.addf %116, %119 : vector<8x128xf32>
    %c1_48 = arith.constant 1 : index
    %c0_49 = arith.constant 0 : index
    %c0_50 = arith.constant 0 : index
    %121 = vector.load %arg9[%c1_48, %c0_49, %c0_50] : memref<2x8x128xf32, #tpu.memory_space<vmem>>, vector<1x8x128xf32>
    %122 = vector.shape_cast %121 : vector<1x8x128xf32> to vector<8x128xf32>
    %123 = vector.shape_cast %120 : vector<8x128xf32> to vector<1x8x128xf32>
    tpu.vector_store %arg9[%c1_48, %c0_49, %c0_50], %123 {strides = array<i32>} : memref<2x8x128xf32, #tpu.memory_space<vmem>>, vector<1x8x128xf32>,
    %c1_51 = arith.constant 1 : index
    %c0_52 = arith.constant 0 : index
    %c0_53 = arith.constant 0 : index
    %124 = vector.load %arg3[%c1_51, %c0_52, %c0_53] : memref<4x6x128xf32, #tpu.memory_space<vmem>>, vector<1x6x128xf32>
    %125 = vector.shape_cast %124 : vector<1x6x128xf32> to vector<6x128xf32>
    %126 = vector.extract_strided_slice %2 {offsets = [0, 128], sizes = [8, 128], strides = [1, 1]} : vector<8x640xf32> to vector<8x128xf32>
    %127 = vector.extract_strided_slice %125 {offsets = [0, 0], sizes = [1, 128], strides = [1, 1]} : vector<6x128xf32> to vector<1x128xf32>
    %128 = vector.broadcast %127 : vector<1x128xf32> to vector<8x128xf32>
    %129 = arith.addf %126, %128 : vector<8x128xf32>
    %130 = vector.extract_strided_slice %125 {offsets = [1, 0], sizes = [1, 128], strides = [1, 1]} : vector<6x128xf32> to vector<1x128xf32>
    %131 = vector.extract_strided_slice %125 {offsets = [2, 0], sizes = [1, 128], strides = [1, 1]} : vector<6x128xf32> to vector<1x128xf32>
    %cst_54 = arith.constant dense<0.000000e+00> : vector<8xf32>
    %132 = vector.multi_reduction <add>, %129, %cst_54 [1] : vector<8x128xf32> to vector<8xf32>
    %133 = vector.shape_cast %132 : vector<8xf32> to vector<8x1xf32>
    %cst_55 = arith.constant 1.280000e+02 : f32
    %134 = vector.broadcast %cst_55 : f32 to vector<8x1xf32>
    %135 = arith.divf %133, %134 : vector<8x1xf32>
    %136 = arith.mulf %129, %129 : vector<8x128xf32>
    %cst_56 = arith.constant dense<0.000000e+00> : vector<8xf32>
    %137 = vector.multi_reduction <add>, %136, %cst_56 [1] : vector<8x128xf32> to vector<8xf32>
    %138 = vector.shape_cast %137 : vector<8xf32> to vector<8x1xf32>
    %cst_57 = arith.constant 1.280000e+02 : f32
    %139 = vector.broadcast %cst_57 : f32 to vector<8x1xf32>
    %140 = arith.divf %138, %139 : vector<8x1xf32>
    %141 = arith.mulf %135, %135 : vector<8x1xf32>
    %142 = arith.subf %140, %141 : vector<8x1xf32>
    %cst_58 = arith.constant 0.000000e+00 : f32
    %143 = vector.broadcast %cst_58 : f32 to vector<8x1xf32>
    %144 = arith.maximumf %142, %143 : vector<8x1xf32>
    %145 = vector.broadcast %135 : vector<8x1xf32> to vector<8x128xf32>
    %146 = arith.subf %129, %145 : vector<8x128xf32>
    %cst_59 = arith.constant 9.99999974E-6 : f32
    %147 = vector.broadcast %cst_59 : f32 to vector<8x1xf32>
    %148 = arith.addf %144, %147 : vector<8x1xf32>
    %149 = math.rsqrt %148 : vector<8x1xf32>
    %150 = vector.broadcast %149 : vector<8x1xf32> to vector<8x128xf32>
    %151 = arith.mulf %146, %150 : vector<8x128xf32>
    %152 = vector.broadcast %130 : vector<1x128xf32> to vector<8x128xf32>
    %153 = arith.mulf %151, %152 : vector<8x128xf32>
    %154 = vector.broadcast %131 : vector<1x128xf32> to vector<8x128xf32>
    %155 = arith.addf %153, %154 : vector<8x128xf32>
    %cst_60 = arith.constant 0.000000e+00 : f32
    %156 = vector.broadcast %cst_60 : f32 to vector<8x128xf32>
    %157 = arith.maximumf %155, %156 : vector<8x128xf32>
    %158 = arith.truncf %157 : vector<8x128xf32> to vector<8x128xbf16>
    %c1_61 = arith.constant 1 : index
    %c0_62 = arith.constant 0 : index
    %c0_63 = arith.constant 0 : index
    %159 = vector.load %arg4[%c1_61, %c0_62, %c0_63] : memref<4x128x128xbf16, #tpu.memory_space<vmem>>, vector<1x128x128xbf16>
    %160 = vector.shape_cast %159 : vector<1x128x128xbf16> to vector<128x128xbf16>
    %cst_64 = arith.constant dense<0.000000e+00> : vector<8x128xf32>
    %161 = tpu.matmul %158, %160, %cst_64 {dimension_numbers = #tpu.dot_dimension_numbers<[1], [0], [0], [1], [0, 0, 1, 1], [], []>} : vector<8x128xbf16>, vector<128x128xbf16>, vector<8x128xf32> -> vector<8x128xf32>
    %162 = vector.extract_strided_slice %125 {offsets = [3, 0], sizes = [1, 128], strides = [1, 1]} : vector<6x128xf32> to vector<1x128xf32>
    %163 = vector.broadcast %162 : vector<1x128xf32> to vector<8x128xf32>
    %164 = arith.addf %161, %163 : vector<8x128xf32>
    %165 = vector.extract_strided_slice %125 {offsets = [4, 0], sizes = [1, 128], strides = [1, 1]} : vector<6x128xf32> to vector<1x128xf32>
    %166 = vector.extract_strided_slice %125 {offsets = [5, 0], sizes = [1, 128], strides = [1, 1]} : vector<6x128xf32> to vector<1x128xf32>
    %cst_65 = arith.constant dense<0.000000e+00> : vector<8xf32>
    %167 = vector.multi_reduction <add>, %164, %cst_65 [1] : vector<8x128xf32> to vector<8xf32>
    %168 = vector.shape_cast %167 : vector<8xf32> to vector<8x1xf32>
    %cst_66 = arith.constant 1.280000e+02 : f32
    %169 = vector.broadcast %cst_66 : f32 to vector<8x1xf32>
    %170 = arith.divf %168, %169 : vector<8x1xf32>
    %171 = arith.mulf %164, %164 : vector<8x128xf32>
    %cst_67 = arith.constant dense<0.000000e+00> : vector<8xf32>
    %172 = vector.multi_reduction <add>, %171, %cst_67 [1] : vector<8x128xf32> to vector<8xf32>
    %173 = vector.shape_cast %172 : vector<8xf32> to vector<8x1xf32>
    %cst_68 = arith.constant 1.280000e+02 : f32
    %174 = vector.broadcast %cst_68 : f32 to vector<8x1xf32>
    %175 = arith.divf %173, %174 : vector<8x1xf32>
    %176 = arith.mulf %170, %170 : vector<8x1xf32>
    %177 = arith.subf %175, %176 : vector<8x1xf32>
    %cst_69 = arith.constant 0.000000e+00 : f32
    %178 = vector.broadcast %cst_69 : f32 to vector<8x1xf32>
    %179 = arith.maximumf %177, %178 : vector<8x1xf32>
    %180 = vector.broadcast %170 : vector<8x1xf32> to vector<8x128xf32>
    %181 = arith.subf %164, %180 : vector<8x128xf32>
    %cst_70 = arith.constant 9.99999974E-6 : f32
    %182 = vector.broadcast %cst_70 : f32 to vector<8x1xf32>
    %183 = arith.addf %179, %182 : vector<8x1xf32>
    %184 = math.rsqrt %183 : vector<8x1xf32>
    %185 = vector.broadcast %184 : vector<8x1xf32> to vector<8x128xf32>
    %186 = arith.mulf %181, %185 : vector<8x128xf32>
    %187 = vector.broadcast %165 : vector<1x128xf32> to vector<8x128xf32>
    %188 = arith.mulf %186, %187 : vector<8x128xf32>
    %189 = vector.broadcast %166 : vector<1x128xf32> to vector<8x128xf32>
    %190 = arith.addf %188, %189 : vector<8x128xf32>
    %cst_71 = arith.constant 0.000000e+00 : f32
    %191 = vector.broadcast %cst_71 : f32 to vector<8x128xf32>
    %192 = arith.maximumf %190, %191 : vector<8x128xf32>
    %c0_72 = arith.constant 0 : index
    %c0_73 = arith.constant 0 : index
    %c0_74 = arith.constant 0 : index
    %193 = vector.load %arg9[%c0_72, %c0_73, %c0_74] : memref<2x8x128xf32, #tpu.memory_space<vmem>>, vector<1x8x128xf32>
    %194 = vector.shape_cast %193 : vector<1x8x128xf32> to vector<8x128xf32>
    %195 = vector.extract_strided_slice %17 {offsets = [0, 1], sizes = [8, 1], strides = [1, 1]} : vector<8x4xf32> to vector<8x1xf32>
    %196 = vector.broadcast %195 : vector<8x1xf32> to vector<8x128xf32>
    %197 = arith.mulf %196, %192 : vector<8x128xf32>
    %198 = arith.addf %194, %197 : vector<8x128xf32>
    %c0_75 = arith.constant 0 : index
    %c0_76 = arith.constant 0 : index
    %c0_77 = arith.constant 0 : index
    %199 = vector.load %arg9[%c0_75, %c0_76, %c0_77] : memref<2x8x128xf32, #tpu.memory_space<vmem>>, vector<1x8x128xf32>
    %200 = vector.shape_cast %199 : vector<1x8x128xf32> to vector<8x128xf32>
    %201 = vector.shape_cast %198 : vector<8x128xf32> to vector<1x8x128xf32>
    tpu.vector_store %arg9[%c0_75, %c0_76, %c0_77], %201 {strides = array<i32>} : memref<2x8x128xf32, #tpu.memory_space<vmem>>, vector<1x8x128xf32>,
    %c1_78 = arith.constant 1 : index
    %c0_79 = arith.constant 0 : index
    %c0_80 = arith.constant 0 : index
    %202 = vector.load %arg9[%c1_78, %c0_79, %c0_80] : memref<2x8x128xf32, #tpu.memory_space<vmem>>, vector<1x8x128xf32>
    %203 = vector.shape_cast %202 : vector<1x8x128xf32> to vector<8x128xf32>
    %204 = vector.extract_strided_slice %31 {offsets = [0, 1], sizes = [8, 1], strides = [1, 1]} : vector<8x4xf32> to vector<8x1xf32>
    %205 = vector.broadcast %204 : vector<8x1xf32> to vector<8x128xf32>
    %206 = arith.mulf %205, %192 : vector<8x128xf32>
    %207 = arith.addf %203, %206 : vector<8x128xf32>
    %c1_81 = arith.constant 1 : index
    %c0_82 = arith.constant 0 : index
    %c0_83 = arith.constant 0 : index
    %208 = vector.load %arg9[%c1_81, %c0_82, %c0_83] : memref<2x8x128xf32, #tpu.memory_space<vmem>>, vector<1x8x128xf32>
    %209 = vector.shape_cast %208 : vector<1x8x128xf32> to vector<8x128xf32>
    %210 = vector.shape_cast %207 : vector<8x128xf32> to vector<1x8x128xf32>
    tpu.vector_store %arg9[%c1_81, %c0_82, %c0_83], %210 {strides = array<i32>} : memref<2x8x128xf32, #tpu.memory_space<vmem>>, vector<1x8x128xf32>,
    %c2 = arith.constant 2 : index
    %c0_84 = arith.constant 0 : index
    %c0_85 = arith.constant 0 : index
    %211 = vector.load %arg3[%c2, %c0_84, %c0_85] : memref<4x6x128xf32, #tpu.memory_space<vmem>>, vector<1x6x128xf32>
    %212 = vector.shape_cast %211 : vector<1x6x128xf32> to vector<6x128xf32>
    %213 = vector.extract_strided_slice %2 {offsets = [0, 256], sizes = [8, 128], strides = [1, 1]} : vector<8x640xf32> to vector<8x128xf32>
    %214 = vector.extract_strided_slice %212 {offsets = [0, 0], sizes = [1, 128], strides = [1, 1]} : vector<6x128xf32> to vector<1x128xf32>
    %215 = vector.broadcast %214 : vector<1x128xf32> to vector<8x128xf32>
    %216 = arith.addf %213, %215 : vector<8x128xf32>
    %217 = vector.extract_strided_slice %212 {offsets = [1, 0], sizes = [1, 128], strides = [1, 1]} : vector<6x128xf32> to vector<1x128xf32>
    %218 = vector.extract_strided_slice %212 {offsets = [2, 0], sizes = [1, 128], strides = [1, 1]} : vector<6x128xf32> to vector<1x128xf32>
    %cst_86 = arith.constant dense<0.000000e+00> : vector<8xf32>
    %219 = vector.multi_reduction <add>, %216, %cst_86 [1] : vector<8x128xf32> to vector<8xf32>
    %220 = vector.shape_cast %219 : vector<8xf32> to vector<8x1xf32>
    %cst_87 = arith.constant 1.280000e+02 : f32
    %221 = vector.broadcast %cst_87 : f32 to vector<8x1xf32>
    %222 = arith.divf %220, %221 : vector<8x1xf32>
    %223 = arith.mulf %216, %216 : vector<8x128xf32>
    %cst_88 = arith.constant dense<0.000000e+00> : vector<8xf32>
    %224 = vector.multi_reduction <add>, %223, %cst_88 [1] : vector<8x128xf32> to vector<8xf32>
    %225 = vector.shape_cast %224 : vector<8xf32> to vector<8x1xf32>
    %cst_89 = arith.constant 1.280000e+02 : f32
    %226 = vector.broadcast %cst_89 : f32 to vector<8x1xf32>
    %227 = arith.divf %225, %226 : vector<8x1xf32>
    %228 = arith.mulf %222, %222 : vector<8x1xf32>
    %229 = arith.subf %227, %228 : vector<8x1xf32>
    %cst_90 = arith.constant 0.000000e+00 : f32
    %230 = vector.broadcast %cst_90 : f32 to vector<8x1xf32>
    %231 = arith.maximumf %229, %230 : vector<8x1xf32>
    %232 = vector.broadcast %222 : vector<8x1xf32> to vector<8x128xf32>
    %233 = arith.subf %216, %232 : vector<8x128xf32>
    %cst_91 = arith.constant 9.99999974E-6 : f32
    %234 = vector.broadcast %cst_91 : f32 to vector<8x1xf32>
    %235 = arith.addf %231, %234 : vector<8x1xf32>
    %236 = math.rsqrt %235 : vector<8x1xf32>
    %237 = vector.broadcast %236 : vector<8x1xf32> to vector<8x128xf32>
    %238 = arith.mulf %233, %237 : vector<8x128xf32>
    %239 = vector.broadcast %217 : vector<1x128xf32> to vector<8x128xf32>
    %240 = arith.mulf %238, %239 : vector<8x128xf32>
    %241 = vector.broadcast %218 : vector<1x128xf32> to vector<8x128xf32>
    %242 = arith.addf %240, %241 : vector<8x128xf32>
    %cst_92 = arith.constant 0.000000e+00 : f32
    %243 = vector.broadcast %cst_92 : f32 to vector<8x128xf32>
    %244 = arith.maximumf %242, %243 : vector<8x128xf32>
    %245 = arith.truncf %244 : vector<8x128xf32> to vector<8x128xbf16>
    %c2_93 = arith.constant 2 : index
    %c0_94 = arith.constant 0 : index
    %c0_95 = arith.constant 0 : index
    %246 = vector.load %arg4[%c2_93, %c0_94, %c0_95] : memref<4x128x128xbf16, #tpu.memory_space<vmem>>, vector<1x128x128xbf16>
    %247 = vector.shape_cast %246 : vector<1x128x128xbf16> to vector<128x128xbf16>
    %cst_96 = arith.constant dense<0.000000e+00> : vector<8x128xf32>
    %248 = tpu.matmul %245, %247, %cst_96 {dimension_numbers = #tpu.dot_dimension_numbers<[1], [0], [0], [1], [0, 0, 1, 1], [], []>} : vector<8x128xbf16>, vector<128x128xbf16>, vector<8x128xf32> -> vector<8x128xf32>
    %249 = vector.extract_strided_slice %212 {offsets = [3, 0], sizes = [1, 128], strides = [1, 1]} : vector<6x128xf32> to vector<1x128xf32>
    %250 = vector.broadcast %249 : vector<1x128xf32> to vector<8x128xf32>
    %251 = arith.addf %248, %250 : vector<8x128xf32>
    %252 = vector.extract_strided_slice %212 {offsets = [4, 0], sizes = [1, 128], strides = [1, 1]} : vector<6x128xf32> to vector<1x128xf32>
    %253 = vector.extract_strided_slice %212 {offsets = [5, 0], sizes = [1, 128], strides = [1, 1]} : vector<6x128xf32> to vector<1x128xf32>
    %cst_97 = arith.constant dense<0.000000e+00> : vector<8xf32>
    %254 = vector.multi_reduction <add>, %251, %cst_97 [1] : vector<8x128xf32> to vector<8xf32>
    %255 = vector.shape_cast %254 : vector<8xf32> to vector<8x1xf32>
    %cst_98 = arith.constant 1.280000e+02 : f32
    %256 = vector.broadcast %cst_98 : f32 to vector<8x1xf32>
    %257 = arith.divf %255, %256 : vector<8x1xf32>
    %258 = arith.mulf %251, %251 : vector<8x128xf32>
    %cst_99 = arith.constant dense<0.000000e+00> : vector<8xf32>
    %259 = vector.multi_reduction <add>, %258, %cst_99 [1] : vector<8x128xf32> to vector<8xf32>
    %260 = vector.shape_cast %259 : vector<8xf32> to vector<8x1xf32>
    %cst_100 = arith.constant 1.280000e+02 : f32
    %261 = vector.broadcast %cst_100 : f32 to vector<8x1xf32>
    %262 = arith.divf %260, %261 : vector<8x1xf32>
    %263 = arith.mulf %257, %257 : vector<8x1xf32>
    %264 = arith.subf %262, %263 : vector<8x1xf32>
    %cst_101 = arith.constant 0.000000e+00 : f32
    %265 = vector.broadcast %cst_101 : f32 to vector<8x1xf32>
    %266 = arith.maximumf %264, %265 : vector<8x1xf32>
    %267 = vector.broadcast %257 : vector<8x1xf32> to vector<8x128xf32>
    %268 = arith.subf %251, %267 : vector<8x128xf32>
    %cst_102 = arith.constant 9.99999974E-6 : f32
    %269 = vector.broadcast %cst_102 : f32 to vector<8x1xf32>
    %270 = arith.addf %266, %269 : vector<8x1xf32>
    %271 = math.rsqrt %270 : vector<8x1xf32>
    %272 = vector.broadcast %271 : vector<8x1xf32> to vector<8x128xf32>
    %273 = arith.mulf %268, %272 : vector<8x128xf32>
    %274 = vector.broadcast %252 : vector<1x128xf32> to vector<8x128xf32>
    %275 = arith.mulf %273, %274 : vector<8x128xf32>
    %276 = vector.broadcast %253 : vector<1x128xf32> to vector<8x128xf32>
    %277 = arith.addf %275, %276 : vector<8x128xf32>
    %cst_103 = arith.constant 0.000000e+00 : f32
    %278 = vector.broadcast %cst_103 : f32 to vector<8x128xf32>
    %279 = arith.maximumf %277, %278 : vector<8x128xf32>
    %c0_104 = arith.constant 0 : index
    %c0_105 = arith.constant 0 : index
    %c0_106 = arith.constant 0 : index
    %280 = vector.load %arg9[%c0_104, %c0_105, %c0_106] : memref<2x8x128xf32, #tpu.memory_space<vmem>>, vector<1x8x128xf32>
    %281 = vector.shape_cast %280 : vector<1x8x128xf32> to vector<8x128xf32>
    %282 = vector.extract_strided_slice %17 {offsets = [0, 2], sizes = [8, 1], strides = [1, 1]} : vector<8x4xf32> to vector<8x1xf32>
    %283 = vector.broadcast %282 : vector<8x1xf32> to vector<8x128xf32>
    %284 = arith.mulf %283, %279 : vector<8x128xf32>
    %285 = arith.addf %281, %284 : vector<8x128xf32>
    %c0_107 = arith.constant 0 : index
    %c0_108 = arith.constant 0 : index
    %c0_109 = arith.constant 0 : index
    %286 = vector.load %arg9[%c0_107, %c0_108, %c0_109] : memref<2x8x128xf32, #tpu.memory_space<vmem>>, vector<1x8x128xf32>
    %287 = vector.shape_cast %286 : vector<1x8x128xf32> to vector<8x128xf32>
    %288 = vector.shape_cast %285 : vector<8x128xf32> to vector<1x8x128xf32>
    tpu.vector_store %arg9[%c0_107, %c0_108, %c0_109], %288 {strides = array<i32>} : memref<2x8x128xf32, #tpu.memory_space<vmem>>, vector<1x8x128xf32>,
    %c1_110 = arith.constant 1 : index
    %c0_111 = arith.constant 0 : index
    %c0_112 = arith.constant 0 : index
    %289 = vector.load %arg9[%c1_110, %c0_111, %c0_112] : memref<2x8x128xf32, #tpu.memory_space<vmem>>, vector<1x8x128xf32>
    %290 = vector.shape_cast %289 : vector<1x8x128xf32> to vector<8x128xf32>
    %291 = vector.extract_strided_slice %31 {offsets = [0, 2], sizes = [8, 1], strides = [1, 1]} : vector<8x4xf32> to vector<8x1xf32>
    %292 = vector.broadcast %291 : vector<8x1xf32> to vector<8x128xf32>
    %293 = arith.mulf %292, %279 : vector<8x128xf32>
    %294 = arith.addf %290, %293 : vector<8x128xf32>
    %c1_113 = arith.constant 1 : index
    %c0_114 = arith.constant 0 : index
    %c0_115 = arith.constant 0 : index
    %295 = vector.load %arg9[%c1_113, %c0_114, %c0_115] : memref<2x8x128xf32, #tpu.memory_space<vmem>>, vector<1x8x128xf32>
    %296 = vector.shape_cast %295 : vector<1x8x128xf32> to vector<8x128xf32>
    %297 = vector.shape_cast %294 : vector<8x128xf32> to vector<1x8x128xf32>
    tpu.vector_store %arg9[%c1_113, %c0_114, %c0_115], %297 {strides = array<i32>} : memref<2x8x128xf32, #tpu.memory_space<vmem>>, vector<1x8x128xf32>,
    %c3 = arith.constant 3 : index
    %c0_116 = arith.constant 0 : index
    %c0_117 = arith.constant 0 : index
    %298 = vector.load %arg3[%c3, %c0_116, %c0_117] : memref<4x6x128xf32, #tpu.memory_space<vmem>>, vector<1x6x128xf32>
    %299 = vector.shape_cast %298 : vector<1x6x128xf32> to vector<6x128xf32>
    %300 = vector.extract_strided_slice %2 {offsets = [0, 384], sizes = [8, 128], strides = [1, 1]} : vector<8x640xf32> to vector<8x128xf32>
    %301 = vector.extract_strided_slice %299 {offsets = [0, 0], sizes = [1, 128], strides = [1, 1]} : vector<6x128xf32> to vector<1x128xf32>
    %302 = vector.broadcast %301 : vector<1x128xf32> to vector<8x128xf32>
    %303 = arith.addf %300, %302 : vector<8x128xf32>
    %304 = vector.extract_strided_slice %299 {offsets = [1, 0], sizes = [1, 128], strides = [1, 1]} : vector<6x128xf32> to vector<1x128xf32>
    %305 = vector.extract_strided_slice %299 {offsets = [2, 0], sizes = [1, 128], strides = [1, 1]} : vector<6x128xf32> to vector<1x128xf32>
    %cst_118 = arith.constant dense<0.000000e+00> : vector<8xf32>
    %306 = vector.multi_reduction <add>, %303, %cst_118 [1] : vector<8x128xf32> to vector<8xf32>
    %307 = vector.shape_cast %306 : vector<8xf32> to vector<8x1xf32>
    %cst_119 = arith.constant 1.280000e+02 : f32
    %308 = vector.broadcast %cst_119 : f32 to vector<8x1xf32>
    %309 = arith.divf %307, %308 : vector<8x1xf32>
    %310 = arith.mulf %303, %303 : vector<8x128xf32>
    %cst_120 = arith.constant dense<0.000000e+00> : vector<8xf32>
    %311 = vector.multi_reduction <add>, %310, %cst_120 [1] : vector<8x128xf32> to vector<8xf32>
    %312 = vector.shape_cast %311 : vector<8xf32> to vector<8x1xf32>
    %cst_121 = arith.constant 1.280000e+02 : f32
    %313 = vector.broadcast %cst_121 : f32 to vector<8x1xf32>
    %314 = arith.divf %312, %313 : vector<8x1xf32>
    %315 = arith.mulf %309, %309 : vector<8x1xf32>
    %316 = arith.subf %314, %315 : vector<8x1xf32>
    %cst_122 = arith.constant 0.000000e+00 : f32
    %317 = vector.broadcast %cst_122 : f32 to vector<8x1xf32>
    %318 = arith.maximumf %316, %317 : vector<8x1xf32>
    %319 = vector.broadcast %309 : vector<8x1xf32> to vector<8x128xf32>
    %320 = arith.subf %303, %319 : vector<8x128xf32>
    %cst_123 = arith.constant 9.99999974E-6 : f32
    %321 = vector.broadcast %cst_123 : f32 to vector<8x1xf32>
    %322 = arith.addf %318, %321 : vector<8x1xf32>
    %323 = math.rsqrt %322 : vector<8x1xf32>
    %324 = vector.broadcast %323 : vector<8x1xf32> to vector<8x128xf32>
    %325 = arith.mulf %320, %324 : vector<8x128xf32>
    %326 = vector.broadcast %304 : vector<1x128xf32> to vector<8x128xf32>
    %327 = arith.mulf %325, %326 : vector<8x128xf32>
    %328 = vector.broadcast %305 : vector<1x128xf32> to vector<8x128xf32>
    %329 = arith.addf %327, %328 : vector<8x128xf32>
    %cst_124 = arith.constant 0.000000e+00 : f32
    %330 = vector.broadcast %cst_124 : f32 to vector<8x128xf32>
    %331 = arith.maximumf %329, %330 : vector<8x128xf32>
    %332 = arith.truncf %331 : vector<8x128xf32> to vector<8x128xbf16>
    %c3_125 = arith.constant 3 : index
    %c0_126 = arith.constant 0 : index
    %c0_127 = arith.constant 0 : index
    %333 = vector.load %arg4[%c3_125, %c0_126, %c0_127] : memref<4x128x128xbf16, #tpu.memory_space<vmem>>, vector<1x128x128xbf16>
    %334 = vector.shape_cast %333 : vector<1x128x128xbf16> to vector<128x128xbf16>
    %cst_128 = arith.constant dense<0.000000e+00> : vector<8x128xf32>
    %335 = tpu.matmul %332, %334, %cst_128 {dimension_numbers = #tpu.dot_dimension_numbers<[1], [0], [0], [1], [0, 0, 1, 1], [], []>} : vector<8x128xbf16>, vector<128x128xbf16>, vector<8x128xf32> -> vector<8x128xf32>
    %336 = vector.extract_strided_slice %299 {offsets = [3, 0], sizes = [1, 128], strides = [1, 1]} : vector<6x128xf32> to vector<1x128xf32>
    %337 = vector.broadcast %336 : vector<1x128xf32> to vector<8x128xf32>
    %338 = arith.addf %335, %337 : vector<8x128xf32>
    %339 = vector.extract_strided_slice %299 {offsets = [4, 0], sizes = [1, 128], strides = [1, 1]} : vector<6x128xf32> to vector<1x128xf32>
    %340 = vector.extract_strided_slice %299 {offsets = [5, 0], sizes = [1, 128], strides = [1, 1]} : vector<6x128xf32> to vector<1x128xf32>
    %cst_129 = arith.constant dense<0.000000e+00> : vector<8xf32>
    %341 = vector.multi_reduction <add>, %338, %cst_129 [1] : vector<8x128xf32> to vector<8xf32>
    %342 = vector.shape_cast %341 : vector<8xf32> to vector<8x1xf32>
    %cst_130 = arith.constant 1.280000e+02 : f32
    %343 = vector.broadcast %cst_130 : f32 to vector<8x1xf32>
    %344 = arith.divf %342, %343 : vector<8x1xf32>
    %345 = arith.mulf %338, %338 : vector<8x128xf32>
    %cst_131 = arith.constant dense<0.000000e+00> : vector<8xf32>
    %346 = vector.multi_reduction <add>, %345, %cst_131 [1] : vector<8x128xf32> to vector<8xf32>
    %347 = vector.shape_cast %346 : vector<8xf32> to vector<8x1xf32>
    %cst_132 = arith.constant 1.280000e+02 : f32
    %348 = vector.broadcast %cst_132 : f32 to vector<8x1xf32>
    %349 = arith.divf %347, %348 : vector<8x1xf32>
    %350 = arith.mulf %344, %344 : vector<8x1xf32>
    %351 = arith.subf %349, %350 : vector<8x1xf32>
    %cst_133 = arith.constant 0.000000e+00 : f32
    %352 = vector.broadcast %cst_133 : f32 to vector<8x1xf32>
    %353 = arith.maximumf %351, %352 : vector<8x1xf32>
    %354 = vector.broadcast %344 : vector<8x1xf32> to vector<8x128xf32>
    %355 = arith.subf %338, %354 : vector<8x128xf32>
    %cst_134 = arith.constant 9.99999974E-6 : f32
    %356 = vector.broadcast %cst_134 : f32 to vector<8x1xf32>
    %357 = arith.addf %353, %356 : vector<8x1xf32>
    %358 = math.rsqrt %357 : vector<8x1xf32>
    %359 = vector.broadcast %358 : vector<8x1xf32> to vector<8x128xf32>
    %360 = arith.mulf %355, %359 : vector<8x128xf32>
    %361 = vector.broadcast %339 : vector<1x128xf32> to vector<8x128xf32>
    %362 = arith.mulf %360, %361 : vector<8x128xf32>
    %363 = vector.broadcast %340 : vector<1x128xf32> to vector<8x128xf32>
    %364 = arith.addf %362, %363 : vector<8x128xf32>
    %cst_135 = arith.constant 0.000000e+00 : f32
    %365 = vector.broadcast %cst_135 : f32 to vector<8x128xf32>
    %366 = arith.maximumf %364, %365 : vector<8x128xf32>
    %c0_136 = arith.constant 0 : index
    %c0_137 = arith.constant 0 : index
    %c0_138 = arith.constant 0 : index
    %367 = vector.load %arg9[%c0_136, %c0_137, %c0_138] : memref<2x8x128xf32, #tpu.memory_space<vmem>>, vector<1x8x128xf32>
    %368 = vector.shape_cast %367 : vector<1x8x128xf32> to vector<8x128xf32>
    %369 = vector.extract_strided_slice %17 {offsets = [0, 3], sizes = [8, 1], strides = [1, 1]} : vector<8x4xf32> to vector<8x1xf32>
    %370 = vector.broadcast %369 : vector<8x1xf32> to vector<8x128xf32>
    %371 = arith.mulf %370, %366 : vector<8x128xf32>
    %372 = arith.addf %368, %371 : vector<8x128xf32>
    %c0_139 = arith.constant 0 : index
    %c0_140 = arith.constant 0 : index
    %c0_141 = arith.constant 0 : index
    %373 = vector.load %arg9[%c0_139, %c0_140, %c0_141] : memref<2x8x128xf32, #tpu.memory_space<vmem>>, vector<1x8x128xf32>
    %374 = vector.shape_cast %373 : vector<1x8x128xf32> to vector<8x128xf32>
    %375 = vector.shape_cast %372 : vector<8x128xf32> to vector<1x8x128xf32>
    tpu.vector_store %arg9[%c0_139, %c0_140, %c0_141], %375 {strides = array<i32>} : memref<2x8x128xf32, #tpu.memory_space<vmem>>, vector<1x8x128xf32>,
    %c1_142 = arith.constant 1 : index
    %c0_143 = arith.constant 0 : index
    %c0_144 = arith.constant 0 : index
    %376 = vector.load %arg9[%c1_142, %c0_143, %c0_144] : memref<2x8x128xf32, #tpu.memory_space<vmem>>, vector<1x8x128xf32>
    %377 = vector.shape_cast %376 : vector<1x8x128xf32> to vector<8x128xf32>
    %378 = vector.extract_strided_slice %31 {offsets = [0, 3], sizes = [8, 1], strides = [1, 1]} : vector<8x4xf32> to vector<8x1xf32>
    %379 = vector.broadcast %378 : vector<8x1xf32> to vector<8x128xf32>
    %380 = arith.mulf %379, %366 : vector<8x128xf32>
    %381 = arith.addf %377, %380 : vector<8x128xf32>
    %c1_145 = arith.constant 1 : index
    %c0_146 = arith.constant 0 : index
    %c0_147 = arith.constant 0 : index
    %382 = vector.load %arg9[%c1_145, %c0_146, %c0_147] : memref<2x8x128xf32, #tpu.memory_space<vmem>>, vector<1x8x128xf32>
    %383 = vector.shape_cast %382 : vector<1x8x128xf32> to vector<8x128xf32>
    %384 = vector.shape_cast %381 : vector<8x128xf32> to vector<1x8x128xf32>
    tpu.vector_store %arg9[%c1_145, %c0_146, %c0_147], %384 {strides = array<i32>} : memref<2x8x128xf32, #tpu.memory_space<vmem>>, vector<1x8x128xf32>,
    %c0_148 = arith.constant 0 : index
    %c0_149 = arith.constant 0 : index
    %c0_150 = arith.constant 0 : index
    %385 = vector.load %arg9[%c0_148, %c0_149, %c0_150] : memref<2x8x128xf32, #tpu.memory_space<vmem>>, vector<1x8x128xf32>
    %386 = vector.shape_cast %385 : vector<1x8x128xf32> to vector<8x128xf32>
    %c0_151 = arith.constant 0 : index
    %387 = memref.load %arg6[%c0_151] : memref<2xf32, #tpu.memory_space<smem>>
    %388 = vector.broadcast %387 : f32 to vector<8x128xf32>
    %389 = arith.mulf %386, %388 : vector<8x128xf32>
    %c0_152 = arith.constant 0 : index
    %c0_153 = arith.constant 0 : index
    %c0_154 = arith.constant 0 : index
    %390 = vector.load %arg7[%c0_152, %c0_153, %c0_154] : memref<2x8x128xf32, #tpu.memory_space<vmem>>, vector<1x8x128xf32>
    %391 = vector.shape_cast %390 : vector<1x8x128xf32> to vector<8x128xf32>
    %392 = vector.shape_cast %389 : vector<8x128xf32> to vector<1x8x128xf32>
    tpu.vector_store %arg7[%c0_152, %c0_153, %c0_154], %392 {strides = array<i32>} : memref<2x8x128xf32, #tpu.memory_space<vmem>>, vector<1x8x128xf32>,
    %c1_155 = arith.constant 1 : index
    %c0_156 = arith.constant 0 : index
    %c0_157 = arith.constant 0 : index
    %393 = vector.load %arg9[%c1_155, %c0_156, %c0_157] : memref<2x8x128xf32, #tpu.memory_space<vmem>>, vector<1x8x128xf32>
    %394 = vector.shape_cast %393 : vector<1x8x128xf32> to vector<8x128xf32>
    %c1_158 = arith.constant 1 : index
    %395 = memref.load %arg6[%c1_158] : memref<2xf32, #tpu.memory_space<smem>>
    %396 = vector.broadcast %395 : f32 to vector<8x128xf32>
    %397 = arith.mulf %394, %396 : vector<8x128xf32>
    %c1_159 = arith.constant 1 : index
    %c0_160 = arith.constant 0 : index
    %c0_161 = arith.constant 0 : index
    %398 = vector.load %arg7[%c1_159, %c0_160, %c0_161] : memref<2x8x128xf32, #tpu.memory_space<vmem>>, vector<1x8x128xf32>
    %399 = vector.shape_cast %398 : vector<1x8x128xf32> to vector<8x128xf32>
    %400 = vector.shape_cast %397 : vector<8x128xf32> to vector<1x8x128xf32>
    tpu.vector_store %arg7[%c1_159, %c0_160, %c0_161], %400 {strides = array<i32>} : memref<2x8x128xf32, #tpu.memory_space<vmem>>, vector<1x8x128xf32>,
    return
  }
  func.func @transform_0(%arg0: i32) -> (i32, i32) {
    %c0_i32 = arith.constant 0 : i32
    %c0_i32_0 = arith.constant 0 : i32
    return %arg0, %c0_i32 : i32, i32
  }
  func.func @transform_1(%arg0: i32) -> (i32, i32) {
    %c0_i32 = arith.constant 0 : i32
    %c0_i32_0 = arith.constant 0 : i32
    %c0_i32_1 = arith.constant 0 : i32
    return %c0_i32, %c0_i32_0 : i32, i32
  }
  func.func @transform_2(%arg0: i32) -> (i32, i32, i32) {
    %c0_i32 = arith.constant 0 : i32
    %c0_i32_0 = arith.constant 0 : i32
    %c0_i32_1 = arith.constant 0 : i32
    %c0_i32_2 = arith.constant 0 : i32
    return %c0_i32, %c0_i32_0, %c0_i32_1 : i32, i32, i32
  }
  func.func @transform_3(%arg0: i32) -> (i32, i32, i32) {
    %c0_i32 = arith.constant 0 : i32
    %c0_i32_0 = arith.constant 0 : i32
    %c0_i32_1 = arith.constant 0 : i32
    %c0_i32_2 = arith.constant 0 : i32
    return %c0_i32, %c0_i32_0, %c0_i32_1 : i32, i32, i32
  }
  func.func @transform_4(%arg0: i32) -> (i32, i32) {
    %c0_i32 = arith.constant 0 : i32
    %c0_i32_0 = arith.constant 0 : i32
    %c0_i32_1 = arith.constant 0 : i32
    return %c0_i32, %c0_i32_0 : i32, i32
  }
  func.func @transform_5(%arg0: i32) -> i32 {
    %c0_i32 = arith.constant 0 : i32
    %c0_i32_0 = arith.constant 0 : i32
    return %c0_i32 : i32
  }
  func.func @transform_6(%arg0: i32) -> (i32, i32, i32) {
    %c0_i32 = arith.constant 0 : i32
    %c0_i32_0 = arith.constant 0 : i32
    %c0_i32_1 = arith.constant 0 : i32
    return %c0_i32, %arg0, %c0_i32_0 : i32, i32, i32
  }
  func.func @transform_7(%arg0: i32) -> (i32, i32, i32) {
    %c0_i32 = arith.constant 0 : i32
    %c0_i32_0 = arith.constant 0 : i32
    %c0_i32_1 = arith.constant 0 : i32
    return %c0_i32, %arg0, %c0_i32_0 : i32, i32, i32
  }
}

</mosaic_0001>

<llo_original>
// kernel: tpu_custom_call.1
$region0: #{tpu_custom_call.1}
  #allocation0 [shape = 'u32[]', space=smem, size = 0x4, offset = 0x4, fixed_abs, tag = 'smem constant byte address 0x4 - core index']
  #allocation1 [shape = 'u32[144,128]{1,0:T(1,128)}', space=vmem, size = 0x12000, scoped, tag = 'internal scratch']
  #allocation2 [shape = 'f32[2,8,128]{2,1,0:T(8,128)}', space=vmem, size = 0x2000, scoped, tag = 'scratch operand']
  %s0 = inlined_call_operand.vmem [shape: bf16[8,128], index: 0, kind: input, shape index: {}]
  %s1 = inlined_call_operand.hbm [shape: bf16[128,640], index: 1, kind: input, shape index: {}]
  %s2 = inlined_call_operand.vmem [shape: f32[4,6,128], index: 2, kind: input, shape index: {}]
  %s3 = inlined_call_operand.hbm [shape: bf16[4,128,128], index: 3, kind: input, shape index: {}]
  %s4 = inlined_call_operand.vmem [shape: f32[1,8], index: 4, kind: input, shape index: {}]
  %s5 = inlined_call_operand.vmem [shape: f32[2], index: 5, kind: input, shape index: {}]
  %s6 = inlined_call_operand.hbm [shape: f32[2,8,128], index: 6, kind: output, shape index: {0}]
  %s7 = inlined_call_operand.vmem [shape: f32[2,8,4], index: 7, kind: output, shape index: {1}]
  %8 = xla_tuple %s6, %s7
  %s9 = sld [smem:[#allocation0]]
  $region54: #{tpu_custom_call.1} parent=0
    _
  %s11 = ssub.s32 1, %s9
  %s12 = scalar_select 0, %s11, %s9
  $region1: #{tpu_custom_call.1} parent=0
    #allocation3 [shape = 'u8[163840]{0}', space=vmem, size = 0x28000, scoped, tag = 'input window, operand 1, single buffered']
    #allocation4 [shape = 's32[1]{0}', space=sflag, size = 0x4, scoped, tag = 'scoped memory for tpu_custom_call.1']
    #allocation5 [shape = 's32[1]{0}', space=sflag, size = 0x4, scoped, tag = 'scoped memory for tpu_custom_call.1']
    #allocation6 [shape = 's32[1]{0}', space=sflag, size = 0x4, scoped, tag = 'scoped memory for tpu_custom_call.1']
    #allocation7 [shape = 'u8[131072]{0}', space=vmem, size = 0x20000, scoped, tag = 'input window, operand 3, single buffered']
    #allocation8 [shape = 's32[1]{0}', space=sflag, size = 0x4, scoped, tag = 'scoped memory for tpu_custom_call.1']
    #allocation9 [shape = 'u8[512]{0}', space=smem, size = 0x200, scoped, tag = 'input window, operand 5, single buffered']
    #allocation10 [shape = 'u8[8192]{0}', space=vmem, size = 0x2000, scoped, tag = 'output window, operand 0, single buffered']
    %13 = vsyncpa [#allocation4], 0
    %14 = vsyncpa [#allocation8], 0
    %15 = vsyncpa [#allocation6], 0
    %16 = vsyncpa [#allocation5], 0
    // Predicated region
    $region2: #{tpu_custom_call.1} parent=1 // pred_check
      _
    $region3: #{tpu_custom_call.1} parent=1 // pred_check_branch
      %18 = sbr.rel (0) target = $region5
    $region4: #{tpu_custom_call.1} parent=1 // pred_region
      _
    $region5: #{tpu_custom_call.1} parent=1 // pred_fallthru
      _
    // Predicated region
    $region6: #{tpu_custom_call.1} parent=1 // pred_check
      _
    $region7: #{tpu_custom_call.1} parent=1 // pred_check_branch
      %20 = sbr.rel (0) target = $region9
    $region8: #{tpu_custom_call.1} parent=1 // pred_region
      %s22 = ssub.s32 5120, 5120
      %23 = vsyncadd [#allocation4], %s22
      %s24 = sshll.u32 [#allocation3], 4
      %s25 = int_to_ptr.vmem [resolvable:$true] %s24
      %30 = dma.hbm_to_vmem [thread:$0]  %s1, 5120, %s25, [#allocation4], 320, 320, 20
    $region9: #{tpu_custom_call.1} parent=1 // pred_fallthru
      _
    // Predicated region
    $region10: #{tpu_custom_call.1} parent=1 // pred_check
      _
    $region11: #{tpu_custom_call.1} parent=1 // pred_check_branch
      %32 = sbr.rel (0) target = $region13
    $region12: #{tpu_custom_call.1} parent=1 // pred_region
      _
    $region13: #{tpu_custom_call.1} parent=1 // pred_fallthru
      _
    // Predicated region
    $region14: #{tpu_custom_call.1} parent=1 // pred_check
      _
    $region15: #{tpu_custom_call.1} parent=1 // pred_check_branch
      %34 = sbr.rel (0) target = $region17
    $region16: #{tpu_custom_call.1} parent=1 // pred_region
      %s36 = ssub.s32 4096, 4096
      %37 = vsyncadd [#allocation8], %s36
      %s38 = sshll.u32 [#allocation7], 4
      %s39 = int_to_ptr.vmem [resolvable:$true] %s38
      %44 = dma.hbm_to_vmem [thread:$0]  %s3, 4096, %s39, [#allocation8], 64, 64, 4
    $region17: #{tpu_custom_call.1} parent=1 // pred_fallthru
      _
    // Predicated region
    $region18: #{tpu_custom_call.1} parent=1 // pred_check
      _
    $region19: #{tpu_custom_call.1} parent=1 // pred_check_branch
      %46 = sbr.rel (0) target = $region21
    $region20: #{tpu_custom_call.1} parent=1 // pred_region
      _
    $region21: #{tpu_custom_call.1} parent=1 // pred_fallthru
      _
    // Predicated region
    $region22: #{tpu_custom_call.1} parent=1 // pred_check
      _
    $region23: #{tpu_custom_call.1} parent=1 // pred_check_branch
      %48 = sbr.rel (0) target = $region25
    $region24: #{tpu_custom_call.1} parent=1 // pred_region
      %s50 = ssub.s32 16, 16
      %51 = vsyncadd [#allocation6], %s50
      %s53 = sshll.u32 %s5, 4
      %s54 = int_to_ptr.vmem [resolvable:$true] %s53
      %56 = dma.vmem_to_smem %s54, 16, [#allocation9], [#allocation6]
    $region25: #{tpu_custom_call.1} parent=1 // pred_fallthru
      _
    // Predicated region
    $region26: #{tpu_custom_call.1} parent=1 // pred_check
      _
    $region27: #{tpu_custom_call.1} parent=1 // pred_check_branch
      %58 = sbr.rel (0) target = $region29
    $region28: #{tpu_custom_call.1} parent=1 // pred_region
      %59 = dma.done [#allocation4], 5120
    $region29: #{tpu_custom_call.1} parent=1 // pred_fallthru
      _
    // Predicated region
    $region30: #{tpu_custom_call.1} parent=1 // pred_check
      _
    $region31: #{tpu_custom_call.1} parent=1 // pred_check_branch
      %61 = sbr.rel (0) target = $region33
    $region32: #{tpu_custom_call.1} parent=1 // pred_region
      %62 = dma.done [#allocation8], 4096
    $region33: #{tpu_custom_call.1} parent=1 // pred_fallthru
      _
    // Predicated region
    $region34: #{tpu_custom_call.1} parent=1 // pred_check
      _
    $region35: #{tpu_custom_call.1} parent=1 // pred_check_branch
      %64 = sbr.rel (0) target = $region37
    $region36: #{tpu_custom_call.1} parent=1 // pred_region
      %65 = dma.done [#allocation6], 16
    $region37: #{tpu_custom_call.1} parent=1 // pred_fallthru
      _
    %66 = sfence
    %v68 = vld [vmem:[%s0] sm:$0xf]
    %v69 = vld [vmem:[#allocation3] sm:$0xff]
    %v70 = vld [vmem:[#allocation3 + $0x8] sm:$0xff]
    %v71 = vld [vmem:[#allocation3 + $0x10] sm:$0xf]
    %v72 = vld [vmem:[#allocation3 + $0x14] sm:$0xff]
    %v73 = vld [vmem:[#allocation3 + $0x1c] sm:$0xff]
    %v74 = vld [vmem:[#allocation3 + $0x24] sm:$0xf]
    %v75 = vld [vmem:[#allocation3 + $0x28] sm:$0xff]
    %v76 = vld [vmem:[#allocation3 + $0x30] sm:$0xff]
    %v77 = vld [vmem:[#allocation3 + $0x38] sm:$0xf]
    %v78 = vld [vmem:[#allocation3 + $0x3c] sm:$0xff]
    %v79 = vld [vmem:[#allocation3 + $0x44] sm:$0xff]
    %v80 = vld [vmem:[#allocation3 + $0x4c] sm:$0xf]
    %v81 = vld [vmem:[#allocation3 + $0x50] sm:$0xff]
    %v82 = vld [vmem:[#allocation3 + $0x58] sm:$0xff]
    %v83 = vld [vmem:[#allocation3 + $0x60] sm:$0xf]
    %v84 = vld [vmem:[#allocation3 + $0x64] sm:$0xff]
    %v85 = vld [vmem:[#allocation3 + $0x6c] sm:$0xff]
    %v86 = vld [vmem:[#allocation3 + $0x74] sm:$0xf]
    %v87 = vld [vmem:[#allocation3 + $0x78] sm:$0xff]
    %v88 = vld [vmem:[#allocation3 + $0x80] sm:$0xff]
    %v89 = vld [vmem:[#allocation3 + $0x88] sm:$0xf]
    %v90 = vld [vmem:[#allocation3 + $0x8c] sm:$0xff]
    %v91 = vld [vmem:[#allocation3 + $0x94] sm:$0xff]
    %v92 = vld [vmem:[#allocation3 + $0x9c] sm:$0xf]
    %v93 = vld [vmem:[#allocation3 + $0xa0] sm:$0xff]
    %v94 = vld [vmem:[#allocation3 + $0xa8] sm:$0xff]
    %v95 = vld [vmem:[#allocation3 + $0xb0] sm:$0xf]
    %v96 = vld [vmem:[#allocation3 + $0xb4] sm:$0xff]
    %v97 = vld [vmem:[#allocation3 + $0xbc] sm:$0xff]
    %v98 = vld [vmem:[#allocation3 + $0xc4] sm:$0xf]
    %v99 = vld [vmem:[#allocation3 + $0xc8] sm:$0xff]
    %v100 = vld [vmem:[#allocation3 + $0xd0] sm:$0xff]
    %v101 = vld [vmem:[#allocation3 + $0xd8] sm:$0xf]
    %v102 = vld [vmem:[#allocation3 + $0xdc] sm:$0xff]
    %v103 = vld [vmem:[#allocation3 + $0xe4] sm:$0xff]
    %v104 = vld [vmem:[#allocation3 + $0xec] sm:$0xf]
    %v105 = vld [vmem:[#allocation3 + $0xf0] sm:$0xff]
    %v106 = vld [vmem:[#allocation3 + $0xf8] sm:$0xff]
    %v107 = vld [vmem:[#allocation3 + $0x100] sm:$0xf]
    %v108 = vld [vmem:[#allocation3 + $0x104] sm:$0xff]
    %v109 = vld [vmem:[#allocation3 + $0x10c] sm:$0xff]
    %v110 = vld [vmem:[#allocation3 + $0x114] sm:$0xf]
    %v111 = vld [vmem:[#allocation3 + $0x118] sm:$0xff]
    %v112 = vld [vmem:[#allocation3 + $0x120] sm:$0xff]
    %v113 = vld [vmem:[#allocation3 + $0x128] sm:$0xf]
    %v114 = vld [vmem:[#allocation3 + $0x12c] sm:$0xff]
    %v115 = vld [vmem:[#allocation3 + $0x134] sm:$0xff]
    %v116 = vld [vmem:[#allocation3 + $0x13c] sm:$0xf]
    %v165 = vunpack.c.l.b16 %v69
    %v166 = vunpack.c.h.b16 %v69
    %v167 = vunpack.c.l.b16 %v70
    %v168 = vunpack.c.h.b16 %v70
    %v169 = vunpack.c.l.b16 %v71
    %v170 = vunpack.c.l.b16 %v72
    %v171 = vunpack.c.h.b16 %v72
    %v172 = vunpack.c.l.b16 %v73
    %v173 = vunpack.c.h.b16 %v73
    %v174 = vunpack.c.l.b16 %v74
    %v175 = vunpack.c.l.b16 %v75
    %v176 = vunpack.c.h.b16 %v75
    %v177 = vunpack.c.l.b16 %v76
    %v178 = vunpack.c.h.b16 %v76
    %v179 = vunpack.c.l.b16 %v77
    %v180 = vunpack.c.l.b16 %v78
    %v181 = vunpack.c.h.b16 %v78
    %v182 = vunpack.c.l.b16 %v79
    %v183 = vunpack.c.h.b16 %v79
    %v184 = vunpack.c.l.b16 %v80
    %v185 = vunpack.c.l.b16 %v81
    %v186 = vunpack.c.h.b16 %v81
    %v187 = vunpack.c.l.b16 %v82
    %v188 = vunpack.c.h.b16 %v82
    %v189 = vunpack.c.l.b16 %v83
    %v190 = vunpack.c.l.b16 %v84
    %v191 = vunpack.c.h.b16 %v84
    %v192 = vunpack.c.l.b16 %v85
    %v193 = vunpack.c.h.b16 %v85
    %v194 = vunpack.c.l.b16 %v86
    %v195 = vunpack.c.l.b16 %v87
    %v196 = vunpack.c.h.b16 %v87
    %v197 = vunpack.c.l.b16 %v88
    %v198 = vunpack.c.h.b16 %v88
    %v199 = vunpack.c.l.b16 %v89
    %v200 = vunpack.c.l.b16 %v90
    %v201 = vunpack.c.h.b16 %v90
    %v202 = vunpack.c.l.b16 %v91
    %v203 = vunpack.c.h.b16 %v91
    %v204 = vunpack.c.l.b16 %v92
    %v205 = vunpack.c.l.b16 %v93
    %v206 = vunpack.c.h.b16 %v93
    %v207 = vunpack.c.l.b16 %v94
    %v208 = vunpack.c.h.b16 %v94
    %v209 = vunpack.c.l.b16 %v95
    %v210 = vunpack.c.l.b16 %v96
    %v211 = vunpack.c.h.b16 %v96
    %v212 = vunpack.c.l.b16 %v97
    %v213 = vunpack.c.h.b16 %v97
    %v214 = vunpack.c.l.b16 %v98
    %v215 = vunpack.c.l.b16 %v99
    %v216 = vunpack.c.h.b16 %v99
    %v217 = vunpack.c.l.b16 %v100
    %v218 = vunpack.c.h.b16 %v100
    %v219 = vunpack.c.l.b16 %v101
    %v220 = vunpack.c.l.b16 %v102
    %v221 = vunpack.c.h.b16 %v102
    %v222 = vunpack.c.l.b16 %v103
    %v223 = vunpack.c.h.b16 %v103
    %v224 = vunpack.c.l.b16 %v104
    %v225 = vunpack.c.l.b16 %v105
    %v226 = vunpack.c.h.b16 %v105
    %v227 = vunpack.c.l.b16 %v106
    %v228 = vunpack.c.h.b16 %v106
    %v229 = vunpack.c.l.b16 %v107
    %v230 = vunpack.c.l.b16 %v108
    %v231 = vunpack.c.h.b16 %v108
    %v232 = vunpack.c.l.b16 %v109
    %v233 = vunpack.c.h.b16 %v109
    %v234 = vunpack.c.l.b16 %v110
    %v235 = vunpack.c.l.b16 %v111
    %v236 = vunpack.c.h.b16 %v111
    %v237 = vunpack.c.l.b16 %v112
    %v238 = vunpack.c.h.b16 %v112
    %v239 = vunpack.c.l.b16 %v113
    %v240 = vunpack.c.l.b16 %v114
    %v241 = vunpack.c.h.b16 %v114
    %v242 = vunpack.c.l.b16 %v115
    %v243 = vunpack.c.h.b16 %v115
    %v244 = vunpack.c.l.b16 %v116
    %v245 = vpack.c.b16 %v170, %v165
    %v246 = vpack.c.b16 %v171, %v166
    %v247 = vpack.c.b16 %v172, %v167
    %v248 = vpack.c.b16 %v173, %v168
    %v249 = vpack.c.b16 %v174, %v169
    %v250 = vpack.c.b16 %v180, %v175
    %v251 = vpack.c.b16 %v181, %v176
    %v252 = vpack.c.b16 %v182, %v177
    %v253 = vpack.c.b16 %v183, %v178
    %v254 = vpack.c.b16 %v184, %v179
    %v255 = vpack.c.b16 %v190, %v185
    %v256 = vpack.c.b16 %v191, %v186
    %v257 = vpack.c.b16 %v192, %v187
    %v258 = vpack.c.b16 %v193, %v188
    %v259 = vpack.c.b16 %v194, %v189
    %v260 = vpack.c.b16 %v200, %v195
    %v261 = vpack.c.b16 %v201, %v196
    %v262 = vpack.c.b16 %v202, %v197
    %v263 = vpack.c.b16 %v203, %v198
    %v264 = vpack.c.b16 %v204, %v199
    %v265 = vpack.c.b16 %v210, %v205
    %v266 = vpack.c.b16 %v211, %v206
    %v267 = vpack.c.b16 %v212, %v207
    %v268 = vpack.c.b16 %v213, %v208
    %v269 = vpack.c.b16 %v214, %v209
    %v270 = vpack.c.b16 %v220, %v215
    %v271 = vpack.c.b16 %v221, %v216
    %v272 = vpack.c.b16 %v222, %v217
    %v273 = vpack.c.b16 %v223, %v218
    %v274 = vpack.c.b16 %v224, %v219
    %v275 = vpack.c.b16 %v230, %v225
    %v276 = vpack.c.b16 %v231, %v226
    %v277 = vpack.c.b16 %v232, %v227
    %v278 = vpack.c.b16 %v233, %v228
    %v279 = vpack.c.b16 %v234, %v229
    %v280 = vpack.c.b16 %v240, %v235
    %v281 = vpack.c.b16 %v241, %v236
    %v282 = vpack.c.b16 %v242, %v237
    %v283 = vpack.c.b16 %v243, %v238
    %v284 = vpack.c.b16 %v244, %v239
    %325 = vmatprep.subr.bf16.mxu0 %v281
    %326 = vmatpush1.bf16.msra.mxu0 %v280
    %327 = vmatprep.subr.bf16.mxu0 %v276
    %328 = vmatpush1.bf16.msra.mxu0 %v275
    %329 = vmatprep.subr.bf16.mxu0 %v271
    %330 = vmatpush1.bf16.msra.mxu0 %v270
    %331 = vmatprep.subr.bf16.mxu0 %v266
    %332 = vmatpush1.bf16.msra.mxu0 %v265
    %333 = vmatprep.subr.bf16.mxu0 %v261
    %334 = vmatpush1.bf16.msra.mxu0 %v260
    %335 = vmatprep.subr.bf16.mxu0 %v256
    %336 = vmatpush1.bf16.msra.mxu0 %v255
    %337 = vmatprep.subr.bf16.mxu0 %v251
    %338 = vmatpush1.bf16.msra.mxu0 %v250
    %339 = vmatprep.subr.bf16.mxu0 %v246
    %340 = vmatpush1.bf16.msra.mxu0 %v245
    %341 = vmatprep.subr.bf16.mxu0 0
    %342 = vmatpush2.bf16.msra.mxu0 0
    %343 = vmatprep.subr.bf16.mxu0 0
    %344 = vmatpush2.bf16.msra.mxu0 0
    %345 = vmatprep.subr.bf16.mxu0 0
    %346 = vmatpush2.bf16.msra.mxu0 0
    %347 = vmatprep.subr.bf16.mxu0 0
    %348 = vmatpush2.bf16.msra.mxu0 0
    %349 = vmatprep.subr.bf16.mxu0 0
    %350 = vmatpush2.bf16.msra.mxu0 0
    %351 = vmatprep.subr.bf16.mxu0 0
    %352 = vmatpush2.bf16.msra.mxu0 0
    %353 = vmatprep.subr.bf16.mxu0 0
    %354 = vmatpush2.bf16.msra.mxu0 0
    %355 = vmatprep.subr.bf16.mxu0 0
    %356 = vmatpush2.bf16.msra.mxu0 0
    %357 = vmatprep.mubr.bf16.mxu0 0
    %358 = vmatmul.mubr.bf16.gmra.mxu0 %v68
    %v359 = vpop.f32.mrf.mxu0
    %v360 = vadd.f32 0.0, %v359
    %v361 = vpop.f32.mrf.mxu0
    %v362 = vadd.f32 0.0, %v361
    %v363 = vpop.f32.mrf.mxu0
    %v364 = vpop.f32.mrf.mxu0
    %365 = vdwg.mxu0
    %366 = vmatprep.subr.bf16.mxu0 %v283
    %367 = vmatpush1.bf16.msra.mxu0 %v282
    %368 = vmatprep.subr.bf16.mxu0 %v278
    %369 = vmatpush1.bf16.msra.mxu0 %v277
    %370 = vmatprep.subr.bf16.mxu0 %v273
    %371 = vmatpush1.bf16.msra.mxu0 %v272
    %372 = vmatprep.subr.bf16.mxu0 %v268
    %373 = vmatpush1.bf16.msra.mxu0 %v267
    %374 = vmatprep.subr.bf16.mxu0 %v263
    %375 = vmatpush1.bf16.msra.mxu0 %v262
    %376 = vmatprep.subr.bf16.mxu0 %v258
    %377 = vmatpush1.bf16.msra.mxu0 %v257
    %378 = vmatprep.subr.bf16.mxu0 %v253
    %379 = vmatpush1.bf16.msra.mxu0 %v252
    %380 = vmatprep.subr.bf16.mxu0 %v248
    %381 = vmatpush1.bf16.msra.mxu0 %v247
    %382 = vmatprep.subr.bf16.mxu0 0
    %383 = vmatpush2.bf16.msra.mxu0 0
    %384 = vmatprep.subr.bf16.mxu0 0
    %385 = vmatpush2.bf16.msra.mxu0 0
    %386 = vmatprep.subr.bf16.mxu0 0
    %387 = vmatpush2.bf16.msra.mxu0 0
    %388 = vmatprep.subr.bf16.mxu0 0
    %389 = vmatpush2.bf16.msra.mxu0 0
    %390 = vmatprep.subr.bf16.mxu0 0
    %391 = vmatpush2.bf16.msra.mxu0 0
    %392 = vmatprep.subr.bf16.mxu0 0
    %393 = vmatpush2.bf16.msra.mxu0 0
    %394 = vmatprep.subr.bf16.mxu0 0
    %395 = vmatpush2.bf16.msra.mxu0 0
    %396 = vmatprep.subr.bf16.mxu0 0
    %397 = vmatpush2.bf16.msra.mxu0 0
    %398 = vmatprep.mubr.bf16.mxu0 0
    %399 = vmatmul.mubr.bf16.gmra.mxu0 %v68
    %v400 = vpop.f32.mrf.mxu0
    %v401 = vadd.f32 0.0, %v400
    %v402 = vpop.f32.mrf.mxu0
    %v403 = vadd.f32 0.0, %v402
    %v404 = vpop.f32.mrf.mxu0
    %v405 = vpop.f32.mrf.mxu0
    %406 = vdwg.mxu0
    %407 = vmatprep.subr.bf16.mxu0 0
    %408 = vmatpush1.bf16.msra.mxu0 %v284
    %409 = vmatprep.subr.bf16.mxu0 0
    %410 = vmatpush1.bf16.msra.mxu0 %v279
    %411 = vmatprep.subr.bf16.mxu0 0
    %412 = vmatpush1.bf16.msra.mxu0 %v274
    %413 = vmatprep.subr.bf16.mxu0 0
    %414 = vmatpush1.bf16.msra.mxu0 %v269
    %415 = vmatprep.subr.bf16.mxu0 0
    %416 = vmatpush1.bf16.msra.mxu0 %v264
    %417 = vmatprep.subr.bf16.mxu0 0
    %418 = vmatpush1.bf16.msra.mxu0 %v259
    %419 = vmatprep.subr.bf16.mxu0 0
    %420 = vmatpush1.bf16.msra.mxu0 %v254
    %421 = vmatprep.subr.bf16.mxu0 0
    %422 = vmatpush1.bf16.msra.mxu0 %v249
    %423 = vmatprep.subr.bf16.mxu0 0
    %424 = vmatpush2.bf16.msra.mxu0 0
    %425 = vmatprep.subr.bf16.mxu0 0
    %426 = vmatpush2.bf16.msra.mxu0 0
    %427 = vmatprep.subr.bf16.mxu0 0
    %428 = vmatpush2.bf16.msra.mxu0 0
    %429 = vmatprep.subr.bf16.mxu0 0
    %430 = vmatpush2.bf16.msra.mxu0 0
    %431 = vmatprep.subr.bf16.mxu0 0
    %432 = vmatpush2.bf16.msra.mxu0 0
    %433 = vmatprep.subr.bf16.mxu0 0
    %434 = vmatpush2.bf16.msra.mxu0 0
    %435 = vmatprep.subr.bf16.mxu0 0
    %436 = vmatpush2.bf16.msra.mxu0 0
    %437 = vmatprep.subr.bf16.mxu0 0
    %438 = vmatpush2.bf16.msra.mxu0 0
    %439 = vmatprep.mubr.bf16.mxu0 0
    %440 = vmatmul.mubr.bf16.gmra.mxu0 %v68
    %v441 = vpop.f32.mrf.mxu0
    %v442 = vadd.f32 0.0, %v441
    %v443 = vpop.f32.mrf.mxu0
    %v444 = vpop.f32.mrf.mxu0
    %v445 = vpop.f32.mrf.mxu0
    %446 = vdwg.mxu0
    %v447 = vld [vmem:[%s4] sm:$0x1]
    %v449 = vlaneseq
    %v450 = vshrl.u32 %v449, 7
    %v451 = vsub.s32 0, %v450
    %v452 = vrot.slane %v447, %v451
    %v454 = vadd.f32 %v442, %v452
    %vm455 = vcmask 31744
    %v456 = vsel %vm455, %v454, -inf
    %457 = vmax.xlane.f32.xlu0 %v456
    %v458 = vpop.xlane.xlu0 %457
    %v459 = vsub.f32 %v454, %v458
    %v460 = vmul.f32 %v459, 1.442695
    %v461 = vpow.pop %v460
    %v462 = vsel %vm455, %v461, 0.0
    %463 = vadd.xlane.f32.xlu0 %v462
    %v464 = vpop.xlane.xlu0 %463
    %v465 = vrcp.pop %v464
    %v466 = vmul.f32 %v461, %v465
    %467 = vst.msk [vmem:[%s7] sm:$0xff] %vm455, %v466
    %vm468 = vcmask 64544
    %v469 = vsel %vm468, %v454, -inf
    %470 = vmax.xlane.f32.xlu0 %v469
    %v471 = vpop.xlane.xlu0 %470
    %v472 = vsub.f32 %v454, %v471
    %v473 = vmul.f32 %v472, 1.442695
    %v474 = vpow.pop %v473
    %476 = vrot.lane.b32.xlu0 %v474, 124
    %v477 = vpop.permute.xlu0 %476
    %v479 = vsel %vm455, %v477, 0.0
    %480 = vadd.xlane.f32.xlu0 %v479
    %v481 = vpop.xlane.xlu0 %480
    %v482 = vrcp.pop %v481
    %v483 = vmul.f32 %v474, %v482
    %485 = vrot.lane.b32.xlu0 %v483, 124
    %v486 = vpop.permute.xlu0 %485
    %s488 = scalar_lea.vmem %s7, 8
    %489 = vst.msk [vmem:[%s488] sm:$0xff] %vm455, %v486
    %490 = vst [vmem:[#allocation2] sm:$0xff] 0.0
    %491 = vst [vmem:[#allocation2 + $0x8] sm:$0xff] 0.0
    %v492 = vld [vmem:[%s2] sm:$0x3f]
    %v493 = vlaneseq
    %v494 = vshrl.u32 %v493, 7
    %v495 = vsub.s32 0, %v494
    %v496 = vrot.slane %v492, %v495
    %v497 = vadd.f32 %v360, %v496
    %498 = vadd.xlane.f32.xlu0 %v497
    %v499 = vpop.xlane.xlu0 %498
    %v500 = vrcp.pop 128.0
    %v501 = vmul.f32 %v499, %v500
    %v502 = vmul.f32 %v497, %v497
    %503 = vadd.xlane.f32.xlu0 %v502
    %v504 = vpop.xlane.xlu0 %503
    %v505 = vmul.f32 %v504, %v500
    %v506 = vmul.f32 %v501, %v501
    %v507 = vsub.f32 %v505, %v506
    %v508 = vmax.f32 %v507, 0.0
    %v509 = vsub.f32 %v497, %v501
    %v510 = vadd.f32 %v508, 1e-05
    %v511 = vrsqrt.pop %v510
    %v512 = vmul.f32 %v509, %v511
    %v513 = vlaneseq
    %v514 = vshrl.u32 %v513, 7
    %v515 = vsub.s32 1, %v514
    %v516 = vrot.slane %v492, %v515
    %v517 = vmul.f32 %v512, %v516
    %v518 = vlaneseq
    %v519 = vshrl.u32 %v518, 7
    %v520 = vsub.s32 2, %v519
    %v521 = vrot.slane %v492, %v520
    %v522 = vadd.f32 %v517, %v521
    %v523 = vmax.f32 %v522, 0.0
    %v524 = vpack.c.bf16 %v523, %v523
    %v525 = vld [vmem:[#allocation7] sm:$0xf]
    %v526 = vld [vmem:[#allocation7 + $0x4] sm:$0xf]
    %v527 = vld [vmem:[#allocation7 + $0x8] sm:$0xf]
    %v528 = vld [vmem:[#allocation7 + $0xc] sm:$0xf]
    %v529 = vld [vmem:[#allocation7 + $0x10] sm:$0xf]
    %v530 = vld [vmem:[#allocation7 + $0x14] sm:$0xf]
    %v531 = vld [vmem:[#allocation7 + $0x18] sm:$0xf]
    %v532 = vld [vmem:[#allocation7 + $0x1c] sm:$0xf]
    %v533 = vld [vmem:[#allocation7 + $0x20] sm:$0xf]
    %v534 = vld [vmem:[#allocation7 + $0x24] sm:$0xf]
    %v535 = vld [vmem:[#allocation7 + $0x28] sm:$0xf]
    %v536 = vld [vmem:[#allocation7 + $0x2c] sm:$0xf]
    %v537 = vld [vmem:[#allocation7 + $0x30] sm:$0xf]
    %v538 = vld [vmem:[#allocation7 + $0x34] sm:$0xf]
    %v539 = vld [vmem:[#allocation7 + $0x38] sm:$0xf]
    %v540 = vld [vmem:[#allocation7 + $0x3c] sm:$0xf]
    %v541 = vlaneseq
    %v542 = vshrl.u32 %v541, 7
    %v543 = vsub.s32 3, %v542
    %v544 = vrot.slane %v492, %v543
    %v561 = vunpack.c.l.b16 %v525
    %v562 = vunpack.c.l.b16 %v526
    %v563 = vunpack.c.l.b16 %v527
    %v564 = vunpack.c.l.b16 %v528
    %v565 = vunpack.c.l.b16 %v529
    %v566 = vunpack.c.l.b16 %v530
    %v567 = vunpack.c.l.b16 %v531
    %v568 = vunpack.c.l.b16 %v532
    %v569 = vunpack.c.l.b16 %v533
    %v570 = vunpack.c.l.b16 %v534
    %v571 = vunpack.c.l.b16 %v535
    %v572 = vunpack.c.l.b16 %v536
    %v573 = vunpack.c.l.b16 %v537
    %v574 = vunpack.c.l.b16 %v538
    %v575 = vunpack.c.l.b16 %v539
    %v576 = vunpack.c.l.b16 %v540
    %v577 = vpack.c.b16 %v562, %v561
    %v578 = vpack.c.b16 %v564, %v563
    %v579 = vpack.c.b16 %v566, %v565
    %v580 = vpack.c.b16 %v568, %v567
    %v581 = vpack.c.b16 %v570, %v569
    %v582 = vpack.c.b16 %v572, %v571
    %v583 = vpack.c.b16 %v574, %v573
    %v584 = vpack.c.b16 %v576, %v575
    %593 = vmatprep.subr.bf16.mxu0 0
    %594 = vmatpush1.bf16.msra.mxu0 %v584
    %595 = vmatprep.subr.bf16.mxu0 0
    %596 = vmatpush1.bf16.msra.mxu0 %v583
    %597 = vmatprep.subr.bf16.mxu0 0
    %598 = vmatpush1.bf16.msra.mxu0 %v582
    %599 = vmatprep.subr.bf16.mxu0 0
    %600 = vmatpush1.bf16.msra.mxu0 %v581
    %601 = vmatprep.subr.bf16.mxu0 0
    %602 = vmatpush1.bf16.msra.mxu0 %v580
    %603 = vmatprep.subr.bf16.mxu0 0
    %604 = vmatpush1.bf16.msra.mxu0 %v579
    %605 = vmatprep.subr.bf16.mxu0 0
    %606 = vmatpush1.bf16.msra.mxu0 %v578
    %607 = vmatprep.subr.bf16.mxu0 0
    %608 = vmatpush1.bf16.msra.mxu0 %v577
    %609 = vmatprep.subr.bf16.mxu0 0
    %610 = vmatpush2.bf16.msra.mxu0 0
    %611 = vmatprep.subr.bf16.mxu0 0
    %612 = vmatpush2.bf16.msra.mxu0 0
    %613 = vmatprep.subr.bf16.mxu0 0
    %614 = vmatpush2.bf16.msra.mxu0 0
    %615 = vmatprep.subr.bf16.mxu0 0
    %616 = vmatpush2.bf16.msra.mxu0 0
    %617 = vmatprep.subr.bf16.mxu0 0
    %618 = vmatpush2.bf16.msra.mxu0 0
    %619 = vmatprep.subr.bf16.mxu0 0
    %620 = vmatpush2.bf16.msra.mxu0 0
    %621 = vmatprep.subr.bf16.mxu0 0
    %622 = vmatpush2.bf16.msra.mxu0 0
    %623 = vmatprep.subr.bf16.mxu0 0
    %624 = vmatpush2.bf16.msra.mxu0 0
    %625 = vmatprep.mubr.bf16.mxu0 0
    %626 = vmatmul.mubr.bf16.gmra.mxu0 %v524
    %v627 = vpop.f32.mrf.mxu0
    %v628 = vadd.f32 %v544, %v627
    %v629 = vpop.f32.mrf.mxu0
    %v630 = vpop.f32.mrf.mxu0
    %v631 = vpop.f32.mrf.mxu0
    %632 = vdwg.mxu0
    %633 = vadd.xlane.f32.xlu0 %v628
    %v634 = vpop.xlane.xlu0 %633
    %v635 = vmul.f32 %v634, %v500
    %v636 = vmul.f32 %v628, %v628
    %637 = vadd.xlane.f32.xlu0 %v636
    %v638 = vpop.xlane.xlu0 %637
    %v639 = vmul.f32 %v638, %v500
    %v640 = vmul.f32 %v635, %v635
    %v641 = vsub.f32 %v639, %v640
    %v642 = vmax.f32 %v641, 0.0
    %v643 = vsub.f32 %v628, %v635
    %v644 = vadd.f32 %v642, 1e-05
    %v645 = vrsqrt.pop %v644
    %v646 = vmul.f32 %v643, %v645
    %v647 = vlaneseq
    %v648 = vshrl.u32 %v647, 7
    %v649 = vsub.s32 4, %v648
    %v650 = vrot.slane %v492, %v649
    %v651 = vmul.f32 %v646, %v650
    %v652 = vlaneseq
    %v653 = vshrl.u32 %v652, 7
    %v654 = vsub.s32 5, %v653
    %v655 = vrot.slane %v492, %v654
    %v656 = vadd.f32 %v651, %v655
    %v657 = vmax.f32 %v656, 0.0
    %v658 = vld [vmem:[#allocation2] sm:$0xff]
    %660 = vset.pattern.permute.xlu0 0
    %661 = vperm.xlu0 %660, %v466
    %v662 = vpop.permute.xlu0 %661
    %v664 = vmul.f32 %v662, %v657
    %v665 = vadd.f32 %v658, %v664
    %666 = vst [vmem:[#allocation2] sm:$0xff] %v665
    %s667 = scalar_lea.vmem [#allocation2], 8
    %v668 = vld [vmem:[%s667] sm:$0xff]
    %669 = vset.pattern.permute.xlu0 4
    %670 = vperm.xlu0 %669, %v483
    %v671 = vpop.permute.xlu0 %670
    %v673 = vmul.f32 %v671, %v657
    %v674 = vadd.f32 %v668, %v673
    %675 = vst [vmem:[%s667] sm:$0xff] %v674
    %s676 = scalar_lea.vmem %s2, 8
    %v677 = vld [vmem:[%s676] sm:$0x3f]
    %v678 = vlaneseq
    %v679 = vshrl.u32 %v678, 7
    %v680 = vsub.s32 0, %v679
    %v681 = vrot.slane %v677, %v680
    %v682 = vadd.f32 %v362, %v681
    %683 = vadd.xlane.f32.xlu0 %v682
    %v684 = vpop.xlane.xlu0 %683
    %v685 = vmul.f32 %v684, %v500
    %v686 = vmul.f32 %v682, %v682
    %687 = vadd.xlane.f32.xlu0 %v686
    %v688 = vpop.xlane.xlu0 %687
    %v689 = vmul.f32 %v688, %v500
    %v690 = vmul.f32 %v685, %v685
    %v691 = vsub.f32 %v689, %v690
    %v692 = vmax.f32 %v691, 0.0
    %v693 = vsub.f32 %v682, %v685
    %v694 = vadd.f32 %v692, 1e-05
    %v695 = vrsqrt.pop %v694
    %v696 = vmul.f32 %v693, %v695
    %v697 = vlaneseq
    %v698 = vshrl.u32 %v697, 7
    %v699 = vsub.s32 1, %v698
    %v700 = vrot.slane %v677, %v699
    %v701 = vmul.f32 %v696, %v700
    %v702 = vlaneseq
    %v703 = vshrl.u32 %v702, 7
    %v704 = vsub.s32 2, %v703
    %v705 = vrot.slane %v677, %v704
    %v706 = vadd.f32 %v701, %v705
    %v707 = vmax.f32 %v706, 0.0
    %v708 = vpack.c.bf16 %v707, %v707
    %s709 = scalar_lea.vmem [#allocation7], 64
    %v710 = vld [vmem:[%s709] sm:$0xf]
    %v711 = vld [vmem:[%s709 + $0x4] sm:$0xf]
    %v712 = vld [vmem:[%s709 + $0x8] sm:$0xf]
    %v713 = vld [vmem:[%s709 + $0xc] sm:$0xf]
    %v714 = vld [vmem:[%s709 + $0x10] sm:$0xf]
    %v715 = vld [vmem:[%s709 + $0x14] sm:$0xf]
    %v716 = vld [vmem:[%s709 + $0x18] sm:$0xf]
    %v717 = vld [vmem:[%s709 + $0x1c] sm:$0xf]
    %v718 = vld [vmem:[%s709 + $0x20] sm:$0xf]
    %v719 = vld [vmem:[%s709 + $0x24] sm:$0xf]
    %v720 = vld [vmem:[%s709 + $0x28] sm:$0xf]
    %v721 = vld [vmem:[%s709 + $0x2c] sm:$0xf]
    %v722 = vld [vmem:[%s709 + $0x30] sm:$0xf]
    %v723 = vld [vmem:[%s709 + $0x34] sm:$0xf]
    %v724 = vld [vmem:[%s709 + $0x38] sm:$0xf]
    %v725 = vld [vmem:[%s709 + $0x3c] sm:$0xf]
    %v726 = vlaneseq
    %v727 = vshrl.u32 %v726, 7
    %v728 = vsub.s32 3, %v727
    %v729 = vrot.slane %v677, %v728
    %v746 = vunpack.c.l.b16 %v710
    %v747 = vunpack.c.l.b16 %v711
    %v748 = vunpack.c.l.b16 %v712
    %v749 = vunpack.c.l.b16 %v713
    %v750 = vunpack.c.l.b16 %v714
    %v751 = vunpack.c.l.b16 %v715
    %v752 = vunpack.c.l.b16 %v716
    %v753 = vunpack.c.l.b16 %v717
    %v754 = vunpack.c.l.b16 %v718
    %v755 = vunpack.c.l.b16 %v719
    %v756 = vunpack.c.l.b16 %v720
    %v757 = vunpack.c.l.b16 %v721
    %v758 = vunpack.c.l.b16 %v722
    %v759 = vunpack.c.l.b16 %v723
    %v760 = vunpack.c.l.b16 %v724
    %v761 = vunpack.c.l.b16 %v725
    %v762 = vpack.c.b16 %v747, %v746
    %v763 = vpack.c.b16 %v749, %v748
    %v764 = vpack.c.b16 %v751, %v750
    %v765 = vpack.c.b16 %v753, %v752
    %v766 = vpack.c.b16 %v755, %v754
    %v767 = vpack.c.b16 %v757, %v756
    %v768 = vpack.c.b16 %v759, %v758
    %v769 = vpack.c.b16 %v761, %v760
    %778 = vmatprep.subr.bf16.mxu0 0
    %779 = vmatpush1.bf16.msra.mxu0 %v769
    %780 = vmatprep.subr.bf16.mxu0 0
    %781 = vmatpush1.bf16.msra.mxu0 %v768
    %782 = vmatprep.subr.bf16.mxu0 0
    %783 = vmatpush1.bf16.msra.mxu0 %v767
    %784 = vmatprep.subr.bf16.mxu0 0
    %785 = vmatpush1.bf16.msra.mxu0 %v766
    %786 = vmatprep.subr.bf16.mxu0 0
    %787 = vmatpush1.bf16.msra.mxu0 %v765
    %788 = vmatprep.subr.bf16.mxu0 0
    %789 = vmatpush1.bf16.msra.mxu0 %v764
    %790 = vmatprep.subr.bf16.mxu0 0
    %791 = vmatpush1.bf16.msra.mxu0 %v763
    %792 = vmatprep.subr.bf16.mxu0 0
    %793 = vmatpush1.bf16.msra.mxu0 %v762
    %794 = vmatprep.subr.bf16.mxu0 0
    %795 = vmatpush2.bf16.msra.mxu0 0
    %796 = vmatprep.subr.bf16.mxu0 0
    %797 = vmatpush2.bf16.msra.mxu0 0
    %798 = vmatprep.subr.bf16.mxu0 0
    %799 = vmatpush2.bf16.msra.mxu0 0
    %800 = vmatprep.subr.bf16.mxu0 0
    %801 = vmatpush2.bf16.msra.mxu0 0
    %802 = vmatprep.subr.bf16.mxu0 0
    %803 = vmatpush2.bf16.msra.mxu0 0
    %804 = vmatprep.subr.bf16.mxu0 0
    %805 = vmatpush2.bf16.msra.mxu0 0
    %806 = vmatprep.subr.bf16.mxu0 0
    %807 = vmatpush2.bf16.msra.mxu0 0
    %808 = vmatprep.subr.bf16.mxu0 0
    %809 = vmatpush2.bf16.msra.mxu0 0
    %810 = vmatprep.mubr.bf16.mxu0 0
    %811 = vmatmul.mubr.bf16.gmra.mxu0 %v708
    %v812 = vpop.f32.mrf.mxu0
    %v813 = vadd.f32 %v729, %v812
    %v814 = vpop.f32.mrf.mxu0
    %v815 = vpop.f32.mrf.mxu0
    %v816 = vpop.f32.mrf.mxu0
    %817 = vdwg.mxu0
    %818 = vadd.xlane.f32.xlu0 %v813
    %v819 = vpop.xlane.xlu0 %818
    %v820 = vmul.f32 %v819, %v500
    %v821 = vmul.f32 %v813, %v813
    %822 = vadd.xlane.f32.xlu0 %v821
    %v823 = vpop.xlane.xlu0 %822
    %v824 = vmul.f32 %v823, %v500
    %v825 = vmul.f32 %v820, %v820
    %v826 = vsub.f32 %v824, %v825
    %v827 = vmax.f32 %v826, 0.0
    %v828 = vsub.f32 %v813, %v820
    %v829 = vadd.f32 %v827, 1e-05
    %v830 = vrsqrt.pop %v829
    %v831 = vmul.f32 %v828, %v830
    %v832 = vlaneseq
    %v833 = vshrl.u32 %v832, 7
    %v834 = vsub.s32 4, %v833
    %v835 = vrot.slane %v677, %v834
    %v836 = vmul.f32 %v831, %v835
    %v837 = vlaneseq
    %v838 = vshrl.u32 %v837, 7
    %v839 = vsub.s32 5, %v838
    %v840 = vrot.slane %v677, %v839
    %v841 = vadd.f32 %v836, %v840
    %v842 = vmax.f32 %v841, 0.0
    %v843 = vld [vmem:[#allocation2] sm:$0xff]
    %844 = vset.pattern.permute.xlu0 1
    %845 = vperm.xlu0 %844, %v466
    %v846 = vpop.permute.xlu0 %845
    %v848 = vmul.f32 %v846, %v842
    %v849 = vadd.f32 %v843, %v848
    %850 = vst [vmem:[#allocation2] sm:$0xff] %v849
    %v851 = vld [vmem:[%s667] sm:$0xff]
    %852 = vset.pattern.permute.xlu0 5
    %853 = vperm.xlu0 %852, %v483
    %v854 = vpop.permute.xlu0 %853
    %v856 = vmul.f32 %v854, %v842
    %v857 = vadd.f32 %v851, %v856
    %858 = vst [vmem:[%s667] sm:$0xff] %v857
    %s859 = scalar_lea.vmem %s2, 16
    %v860 = vld [vmem:[%s859] sm:$0x3f]
    %v861 = vlaneseq
    %v862 = vshrl.u32 %v861, 7
    %v863 = vsub.s32 0, %v862
    %v864 = vrot.slane %v860, %v863
    %v865 = vadd.f32 %v401, %v864
    %866 = vadd.xlane.f32.xlu0 %v865
    %v867 = vpop.xlane.xlu0 %866
    %v868 = vmul.f32 %v867, %v500
    %v869 = vmul.f32 %v865, %v865
    %870 = vadd.xlane.f32.xlu0 %v869
    %v871 = vpop.xlane.xlu0 %870
    %v872 = vmul.f32 %v871, %v500
    %v873 = vmul.f32 %v868, %v868
    %v874 = vsub.f32 %v872, %v873
    %v875 = vmax.f32 %v874, 0.0
    %v876 = vsub.f32 %v865, %v868
    %v877 = vadd.f32 %v875, 1e-05
    %v878 = vrsqrt.pop %v877
    %v879 = vmul.f32 %v876, %v878
    %v880 = vlaneseq
    %v881 = vshrl.u32 %v880, 7
    %v882 = vsub.s32 1, %v881
    %v883 = vrot.slane %v860, %v882
    %v884 = vmul.f32 %v879, %v883
    %v885 = vlaneseq
    %v886 = vshrl.u32 %v885, 7
    %v887 = vsub.s32 2, %v886
    %v888 = vrot.slane %v860, %v887
    %v889 = vadd.f32 %v884, %v888
    %v890 = vmax.f32 %v889, 0.0
    %v891 = vpack.c.bf16 %v890, %v890
    %s892 = scalar_lea.vmem [#allocation7], 128
    %v893 = vld [vmem:[%s892] sm:$0xf]
    %v894 = vld [vmem:[%s892 + $0x4] sm:$0xf]
    %v895 = vld [vmem:[%s892 + $0x8] sm:$0xf]
    %v896 = vld [vmem:[%s892 + $0xc] sm:$0xf]
    %v897 = vld [vmem:[%s892 + $0x10] sm:$0xf]
    %v898 = vld [vmem:[%s892 + $0x14] sm:$0xf]
    %v899 = vld [vmem:[%s892 + $0x18] sm:$0xf]
    %v900 = vld [vmem:[%s892 + $0x1c] sm:$0xf]
    %v901 = vld [vmem:[%s892 + $0x20] sm:$0xf]
    %v902 = vld [vmem:[%s892 + $0x24] sm:$0xf]
    %v903 = vld [vmem:[%s892 + $0x28] sm:$0xf]
    %v904 = vld [vmem:[%s892 + $0x2c] sm:$0xf]
    %v905 = vld [vmem:[%s892 + $0x30] sm:$0xf]
    %v906 = vld [vmem:[%s892 + $0x34] sm:$0xf]
    %v907 = vld [vmem:[%s892 + $0x38] sm:$0xf]
    %v908 = vld [vmem:[%s892 + $0x3c] sm:$0xf]
    %v909 = vlaneseq
    %v910 = vshrl.u32 %v909, 7
    %v911 = vsub.s32 3, %v910
    %v912 = vrot.slane %v860, %v911
    %v929 = vunpack.c.l.b16 %v893
    %v930 = vunpack.c.l.b16 %v894
    %v931 = vunpack.c.l.b16 %v895
    %v932 = vunpack.c.l.b16 %v896
    %v933 = vunpack.c.l.b16 %v897
    %v934 = vunpack.c.l.b16 %v898
    %v935 = vunpack.c.l.b16 %v899
    %v936 = vunpack.c.l.b16 %v900
    %v937 = vunpack.c.l.b16 %v901
    %v938 = vunpack.c.l.b16 %v902
    %v939 = vunpack.c.l.b16 %v903
    %v940 = vunpack.c.l.b16 %v904
    %v941 = vunpack.c.l.b16 %v905
    %v942 = vunpack.c.l.b16 %v906
    %v943 = vunpack.c.l.b16 %v907
    %v944 = vunpack.c.l.b16 %v908
    %v945 = vpack.c.b16 %v930, %v929
    %v946 = vpack.c.b16 %v932, %v931
    %v947 = vpack.c.b16 %v934, %v933
    %v948 = vpack.c.b16 %v936, %v935
    %v949 = vpack.c.b16 %v938, %v937
    %v950 = vpack.c.b16 %v940, %v939
    %v951 = vpack.c.b16 %v942, %v941
    %v952 = vpack.c.b16 %v944, %v943
    %961 = vmatprep.subr.bf16.mxu0 0
    %962 = vmatpush1.bf16.msra.mxu0 %v952
    %963 = vmatprep.subr.bf16.mxu0 0
    %964 = vmatpush1.bf16.msra.mxu0 %v951
    %965 = vmatprep.subr.bf16.mxu0 0
    %966 = vmatpush1.bf16.msra.mxu0 %v950
    %967 = vmatprep.subr.bf16.mxu0 0
    %968 = vmatpush1.bf16.msra.mxu0 %v949
    %969 = vmatprep.subr.bf16.mxu0 0
    %970 = vmatpush1.bf16.msra.mxu0 %v948
    %971 = vmatprep.subr.bf16.mxu0 0
    %972 = vmatpush1.bf16.msra.mxu0 %v947
    %973 = vmatprep.subr.bf16.mxu0 0
    %974 = vmatpush1.bf16.msra.mxu0 %v946
    %975 = vmatprep.subr.bf16.mxu0 0
    %976 = vmatpush1.bf16.msra.mxu0 %v945
    %977 = vmatprep.subr.bf16.mxu0 0
    %978 = vmatpush2.bf16.msra.mxu0 0
    %979 = vmatprep.subr.bf16.mxu0 0
    %980 = vmatpush2.bf16.msra.mxu0 0
    %981 = vmatprep.subr.bf16.mxu0 0
    %982 = vmatpush2.bf16.msra.mxu0 0
    %983 = vmatprep.subr.bf16.mxu0 0
    %984 = vmatpush2.bf16.msra.mxu0 0
    %985 = vmatprep.subr.bf16.mxu0 0
    %986 = vmatpush2.bf16.msra.mxu0 0
    %987 = vmatprep.subr.bf16.mxu0 0
    %988 = vmatpush2.bf16.msra.mxu0 0
    %989 = vmatprep.subr.bf16.mxu0 0
    %990 = vmatpush2.bf16.msra.mxu0 0
    %991 = vmatprep.subr.bf16.mxu0 0
    %992 = vmatpush2.bf16.msra.mxu0 0
    %993 = vmatprep.mubr.bf16.mxu0 0
    %994 = vmatmul.mubr.bf16.gmra.mxu0 %v891
    %v995 = vpop.f32.mrf.mxu0
    %v996 = vadd.f32 %v912, %v995
    %v997 = vpop.f32.mrf.mxu0
    %v998 = vpop.f32.mrf.mxu0
    %v999 = vpop.f32.mrf.mxu0
    %1000 = vdwg.mxu0
    %1001 = vadd.xlane.f32.xlu0 %v996
    %v1002 = vpop.xlane.xlu0 %1001
    %v1003 = vmul.f32 %v1002, %v500
    %v1004 = vmul.f32 %v996, %v996
    %1005 = vadd.xlane.f32.xlu0 %v1004
    %v1006 = vpop.xlane.xlu0 %1005
    %v1007 = vmul.f32 %v1006, %v500
    %v1008 = vmul.f32 %v1003, %v1003
    %v1009 = vsub.f32 %v1007, %v1008
    %v1010 = vmax.f32 %v1009, 0.0
    %v1011 = vsub.f32 %v996, %v1003
    %v1012 = vadd.f32 %v1010, 1e-05
    %v1013 = vrsqrt.pop %v1012
    %v1014 = vmul.f32 %v1011, %v1013
    %v1015 = vlaneseq
    %v1016 = vshrl.u32 %v1015, 7
    %v1017 = vsub.s32 4, %v1016
    %v1018 = vrot.slane %v860, %v1017
    %v1019 = vmul.f32 %v1014, %v1018
    %v1020 = vlaneseq
    %v1021 = vshrl.u32 %v1020, 7
    %v1022 = vsub.s32 5, %v1021
    %v1023 = vrot.slane %v860, %v1022
    %v1024 = vadd.f32 %v1019, %v1023
    %v1025 = vmax.f32 %v1024, 0.0
    %v1026 = vld [vmem:[#allocation2] sm:$0xff]
    %1027 = vset.pattern.permute.xlu0 2
    %1028 = vperm.xlu0 %1027, %v466
    %v1029 = vpop.permute.xlu0 %1028
    %v1031 = vmul.f32 %v1029, %v1025
    %v1032 = vadd.f32 %v1026, %v1031
    %1033 = vst [vmem:[#allocation2] sm:$0xff] %v1032
    %v1034 = vld [vmem:[%s667] sm:$0xff]
    %1035 = vset.pattern.permute.xlu0 6
    %1036 = vperm.xlu0 %1035, %v483
    %v1037 = vpop.permute.xlu0 %1036
    %v1039 = vmul.f32 %v1037, %v1025
    %v1040 = vadd.f32 %v1034, %v1039
    %1041 = vst [vmem:[%s667] sm:$0xff] %v1040
    %s1042 = scalar_lea.vmem %s2, 24
    %v1043 = vld [vmem:[%s1042] sm:$0x3f]
    %v1044 = vlaneseq
    %v1045 = vshrl.u32 %v1044, 7
    %v1046 = vsub.s32 0, %v1045
    %v1047 = vrot.slane %v1043, %v1046
    %v1048 = vadd.f32 %v403, %v1047
    %1049 = vadd.xlane.f32.xlu0 %v1048
    %v1050 = vpop.xlane.xlu0 %1049
    %v1051 = vmul.f32 %v1050, %v500
    %v1052 = vmul.f32 %v1048, %v1048
    %1053 = vadd.xlane.f32.xlu0 %v1052
    %v1054 = vpop.xlane.xlu0 %1053
    %v1055 = vmul.f32 %v1054, %v500
    %v1056 = vmul.f32 %v1051, %v1051
    %v1057 = vsub.f32 %v1055, %v1056
    %v1058 = vmax.f32 %v1057, 0.0
    %v1059 = vsub.f32 %v1048, %v1051
    %v1060 = vadd.f32 %v1058, 1e-05
    %v1061 = vrsqrt.pop %v1060
    %v1062 = vmul.f32 %v1059, %v1061
    %v1063 = vlaneseq
    %v1064 = vshrl.u32 %v1063, 7
    %v1065 = vsub.s32 1, %v1064
    %v1066 = vrot.slane %v1043, %v1065
    %v1067 = vmul.f32 %v1062, %v1066
    %v1068 = vlaneseq
    %v1069 = vshrl.u32 %v1068, 7
    %v1070 = vsub.s32 2, %v1069
    %v1071 = vrot.slane %v1043, %v1070
    %v1072 = vadd.f32 %v1067, %v1071
    %v1073 = vmax.f32 %v1072, 0.0
    %v1074 = vpack.c.bf16 %v1073, %v1073
    %s1075 = scalar_lea.vmem [#allocation7], 192
    %v1076 = vld [vmem:[%s1075] sm:$0xf]
    %v1077 = vld [vmem:[%s1075 + $0x4] sm:$0xf]
    %v1078 = vld [vmem:[%s1075 + $0x8] sm:$0xf]
    %v1079 = vld [vmem:[%s1075 + $0xc] sm:$0xf]
    %v1080 = vld [vmem:[%s1075 + $0x10] sm:$0xf]
    %v1081 = vld [vmem:[%s1075 + $0x14] sm:$0xf]
    %v1082 = vld [vmem:[%s1075 + $0x18] sm:$0xf]
    %v1083 = vld [vmem:[%s1075 + $0x1c] sm:$0xf]
    %v1084 = vld [vmem:[%s1075 + $0x20] sm:$0xf]
    %v1085 = vld [vmem:[%s1075 + $0x24] sm:$0xf]
    %v1086 = vld [vmem:[%s1075 + $0x28] sm:$0xf]
    %v1087 = vld [vmem:[%s1075 + $0x2c] sm:$0xf]
    %v1088 = vld [vmem:[%s1075 + $0x30] sm:$0xf]
    %v1089 = vld [vmem:[%s1075 + $0x34] sm:$0xf]
    %v1090 = vld [vmem:[%s1075 + $0x38] sm:$0xf]
    %v1091 = vld [vmem:[%s1075 + $0x3c] sm:$0xf]
    %v1092 = vlaneseq
    %v1093 = vshrl.u32 %v1092, 7
    %v1094 = vsub.s32 3, %v1093
    %v1095 = vrot.slane %v1043, %v1094
    %v1112 = vunpack.c.l.b16 %v1076
    %v1113 = vunpack.c.l.b16 %v1077
    %v1114 = vunpack.c.l.b16 %v1078
    %v1115 = vunpack.c.l.b16 %v1079
    %v1116 = vunpack.c.l.b16 %v1080
    %v1117 = vunpack.c.l.b16 %v1081
    %v1118 = vunpack.c.l.b16 %v1082
    %v1119 = vunpack.c.l.b16 %v1083
    %v1120 = vunpack.c.l.b16 %v1084
    %v1121 = vunpack.c.l.b16 %v1085
    %v1122 = vunpack.c.l.b16 %v1086
    %v1123 = vunpack.c.l.b16 %v1087
    %v1124 = vunpack.c.l.b16 %v1088
    %v1125 = vunpack.c.l.b16 %v1089
    %v1126 = vunpack.c.l.b16 %v1090
    %v1127 = vunpack.c.l.b16 %v1091
    %v1128 = vpack.c.b16 %v1113, %v1112
    %v1129 = vpack.c.b16 %v1115, %v1114
    %v1130 = vpack.c.b16 %v1117, %v1116
    %v1131 = vpack.c.b16 %v1119, %v1118
    %v1132 = vpack.c.b16 %v1121, %v1120
    %v1133 = vpack.c.b16 %v1123, %v1122
    %v1134 = vpack.c.b16 %v1125, %v1124
    %v1135 = vpack.c.b16 %v1127, %v1126
    %1144 = vmatprep.subr.bf16.mxu0 0
    %1145 = vmatpush1.bf16.msra.mxu0 %v1135
    %1146 = vmatprep.subr.bf16.mxu0 0
    %1147 = vmatpush1.bf16.msra.mxu0 %v1134
    %1148 = vmatprep.subr.bf16.mxu0 0
    %1149 = vmatpush1.bf16.msra.mxu0 %v1133
    %1150 = vmatprep.subr.bf16.mxu0 0
    %1151 = vmatpush1.bf16.msra.mxu0 %v1132
    %1152 = vmatprep.subr.bf16.mxu0 0
    %1153 = vmatpush1.bf16.msra.mxu0 %v1131
    %1154 = vmatprep.subr.bf16.mxu0 0
    %1155 = vmatpush1.bf16.msra.mxu0 %v1130
    %1156 = vmatprep.subr.bf16.mxu0 0
    %1157 = vmatpush1.bf16.msra.mxu0 %v1129
    %1158 = vmatprep.subr.bf16.mxu0 0
    %1159 = vmatpush1.bf16.msra.mxu0 %v1128
    %1160 = vmatprep.subr.bf16.mxu0 0
    %1161 = vmatpush2.bf16.msra.mxu0 0
    %1162 = vmatprep.subr.bf16.mxu0 0
    %1163 = vmatpush2.bf16.msra.mxu0 0
    %1164 = vmatprep.subr.bf16.mxu0 0
    %1165 = vmatpush2.bf16.msra.mxu0 0
    %1166 = vmatprep.subr.bf16.mxu0 0
    %1167 = vmatpush2.bf16.msra.mxu0 0
    %1168 = vmatprep.subr.bf16.mxu0 0
    %1169 = vmatpush2.bf16.msra.mxu0 0
    %1170 = vmatprep.subr.bf16.mxu0 0
    %1171 = vmatpush2.bf16.msra.mxu0 0
    %1172 = vmatprep.subr.bf16.mxu0 0
    %1173 = vmatpush2.bf16.msra.mxu0 0
    %1174 = vmatprep.subr.bf16.mxu0 0
    %1175 = vmatpush2.bf16.msra.mxu0 0
    %1176 = vmatprep.mubr.bf16.mxu0 0
    %1177 = vmatmul.mubr.bf16.gmra.mxu0 %v1074
    %v1178 = vpop.f32.mrf.mxu0
    %v1179 = vadd.f32 %v1095, %v1178
    %v1180 = vpop.f32.mrf.mxu0
    %v1181 = vpop.f32.mrf.mxu0
    %v1182 = vpop.f32.mrf.mxu0
    %1183 = vdwg.mxu0
    %1184 = vadd.xlane.f32.xlu0 %v1179
    %v1185 = vpop.xlane.xlu0 %1184
    %v1186 = vmul.f32 %v1185, %v500
    %v1187 = vmul.f32 %v1179, %v1179
    %1188 = vadd.xlane.f32.xlu0 %v1187
    %v1189 = vpop.xlane.xlu0 %1188
    %v1190 = vmul.f32 %v1189, %v500
    %v1191 = vmul.f32 %v1186, %v1186
    %v1192 = vsub.f32 %v1190, %v1191
    %v1193 = vmax.f32 %v1192, 0.0
    %v1194 = vsub.f32 %v1179, %v1186
    %v1195 = vadd.f32 %v1193, 1e-05
    %v1196 = vrsqrt.pop %v1195
    %v1197 = vmul.f32 %v1194, %v1196
    %v1198 = vlaneseq
    %v1199 = vshrl.u32 %v1198, 7
    %v1200 = vsub.s32 4, %v1199
    %v1201 = vrot.slane %v1043, %v1200
    %v1202 = vmul.f32 %v1197, %v1201
    %v1203 = vlaneseq
    %v1204 = vshrl.u32 %v1203, 7
    %v1205 = vsub.s32 5, %v1204
    %v1206 = vrot.slane %v1043, %v1205
    %v1207 = vadd.f32 %v1202, %v1206
    %v1208 = vmax.f32 %v1207, 0.0
    %v1209 = vld [vmem:[#allocation2] sm:$0xff]
    %1210 = vset.pattern.permute.xlu0 3
    %1211 = vperm.xlu0 %1210, %v466
    %v1212 = vpop.permute.xlu0 %1211
    %v1214 = vmul.f32 %v1212, %v1208
    %v1215 = vadd.f32 %v1209, %v1214
    %1216 = vst [vmem:[#allocation2] sm:$0xff] %v1215
    %v1217 = vld [vmem:[%s667] sm:$0xff]
    %1218 = vset.pattern.permute.xlu0 7
    %1219 = vperm.xlu0 %1218, %v483
    %v1220 = vpop.permute.xlu0 %1219
    %v1222 = vmul.f32 %v1220, %v1208
    %v1223 = vadd.f32 %v1217, %v1222
    %1224 = vst [vmem:[%s667] sm:$0xff] %v1223
    %v1225 = vld [vmem:[#allocation2] sm:$0xff]
    %s1226 = sld [smem:[#allocation9]]
    %v1227 = vstv %s1226
    %v1228 = vmul.f32 %v1225, %v1227
    %1229 = vst [vmem:[#allocation10] sm:$0xff] %v1228
    %v1230 = vld [vmem:[%s667] sm:$0xff]
    %s1231 = sld [smem:[#allocation9 + $0x1]]
    %v1232 = vstv %s1231
    %v1233 = vmul.f32 %v1230, %v1232
    %s1234 = scalar_lea.vmem [#allocation10], 8
    %1235 = vst [vmem:[%s1234] sm:$0xff] %v1233
    // Predicated region
    $region38: #{tpu_custom_call.1} parent=1 // pred_check
      _
    $region39: #{tpu_custom_call.1} parent=1 // pred_check_branch
      %1237 = sbr.rel (0) target = $region41
    $region40: #{tpu_custom_call.1} parent=1 // pred_region
      %s1239 = ssub.s32 256, 256
      %1240 = vsyncadd [#allocation5], %s1239
      %s1241 = sshll.u32 [#allocation10], 4
      %s1242 = int_to_ptr.vmem [resolvable:$true] %s1241
      %1247 = dma.vmem_to_hbm [thread:$0]  %s1242, 256, %s6, [#allocation5], 128, 128, 8
    $region41: #{tpu_custom_call.1} parent=1 // pred_fallthru
      _
    // Predicated region
    $region42: #{tpu_custom_call.1} parent=1 // pred_check
      _
    $region43: #{tpu_custom_call.1} parent=1 // pred_check_branch
      %1249 = sbr.rel (0) target = $region45
    $region44: #{tpu_custom_call.1} parent=1 // pred_region
      _
    $region45: #{tpu_custom_call.1} parent=1 // pred_fallthru
      _
    // Predicated region
    $region46: #{tpu_custom_call.1} parent=1 // pred_check
      _
    $region47: #{tpu_custom_call.1} parent=1 // pred_check_branch
      %1251 = sbr.rel (0) target = $region49
    $region48: #{tpu_custom_call.1} parent=1 // pred_region
      %1252 = dma.done [#allocation5], 256
    $region49: #{tpu_custom_call.1} parent=1 // pred_fallthru
      _
    // Predicated region
    $region50: #{tpu_custom_call.1} parent=1 // pred_check
      _
    $region51: #{tpu_custom_call.1} parent=1 // pred_check_branch
      %1254 = sbr.rel (0) target = $region53
    $region52: #{tpu_custom_call.1} parent=1 // pred_region
      _
    $region53: #{tpu_custom_call.1} parent=1 // pred_fallthru
      _
    %1255 = vsyncpa [#allocation4], 1
    %1256 = vsyncpa [#allocation8], 1
    %1257 = vsyncpa [#allocation5], 1
    %1258 = vsyncpa [#allocation6], 1

</llo_original>
